<compile_context>
chip_gen: v6e
topology: v6e:2x2x1
jax: 0.10.0
libtpu: 0.0.40
codegen_flags: <defaults>
</compile_context>

<pallas_src>
import functools

import jax
import jax.numpy as jnp
import numpy as np
from jax.experimental import pallas as pl
from jax.experimental.pallas import tpu as pltpu


def _tap_masks(H, W):
    """(9, H*W) float32 validity masks for the 3x3 taps of a zero-padded conv."""
    idx = np.arange(H * W)
    h, w = idx // W, idx % W
    rows = []
    for dh in (-1, 0, 1):
        for dw in (-1, 0, 1):
            ok = (h + dh >= 0) & (h + dh < H) & (w + dw >= 0) & (w + dw < W)
            rows.append(ok.astype(np.float32))
    return jnp.asarray(np.stack(rows))


def _residual_block_kernel(x_ref, mask_ref, w1_ref, b1_ref, w2_ref, b2_ref,
                           out_ref, *, H, W, C):
    """One batch block of NB images, all channels, in flat pixels-in-lanes form.

    x_ref    : (C, NB, H*W)  VMEM   channel-major, lane-dense image planes
    mask_ref : (9, H*W)      VMEM   0/1 zero-padding validity mask per 3x3 tap
    w{1,2}   : (C*C*3*3,)    SMEM   flattened OIHW conv weights
    b{1,2}   : (C,)          SMEM   conv biases
    out_ref  : (C, NB, H*W)  VMEM
    """
    NB = x_ref.shape[1]
    HW = H * W
    taps = [(dh, dw) for dh in (-1, 0, 1) for dw in (-1, 0, 1)]

    def conv3x3_relu(planes, w_ref, b_ref):
        # One (NB, HW) accumulator per output channel; NB rides the sublanes,
        # the flattened image rides the lanes, so every MAC uses dense vregs.
        acc = [jnp.zeros((NB, HW), jnp.float32) + b_ref[o] for o in range(C)]
        for t, (dh, dw) in enumerate(taps):
            off = dh * W + dw                       # flat-index offset of tap
            if (dh, dw) == (0, 0):
                m = None                            # centre tap: all valid
            else:
                # Boundary mask, broadcast over NB once per tap (hoisted so no
                # per-MAC broadcast_in_dim is emitted).
                m = jnp.broadcast_to(mask_ref[t], (NB, HW))
            for ci in range(C):
                tap = planes[ci]
                if off != 0:
                    # tap[idx] = plane[idx + off]; wrap-arounds are masked off.
                    tap = pltpu.roll(tap, (-off) % HW, axis=1)
                if m is not None:
                    tap = tap * m
                for co in range(C):                 # C independent acc chains
                    kidx = ((co * C + ci) * 3 + (dh + 1)) * 3 + (dw + 1)
                    acc[co] = acc[co] + tap * w_ref[kidx]
        return [jnp.maximum(a, 0.0) for a in acc]

    x_planes = [x_ref[ci] for ci in range(C)]       # C x (NB, HW)
    mid = conv3x3_relu(x_planes, w1_ref, b1_ref)    # relu(conv1(x))
    y = conv3x3_relu(mid, w2_ref, b2_ref)           # relu(conv2(.))
    for co in range(C):
        out_ref[co] = y[co] + x_planes[co]          # residual add


def simple_residual_block(x, w1, b1, w2, b2, *, max_images_per_step=8):
    """x: (N, C, H, W) NCHW float32; w*: (C, C, 3, 3) OIHW; b*: (C,)."""
    x = x.astype(jnp.float32)
    N, C, H, W = x.shape
    HW = H * W

    # Fold as much of the batch as possible into one grid step (amortizes the
    # per-step overhead); cap at 8 so each (NB, HW) slab exactly fills the 8
    # sublanes of a vreg without pushing accumulators out of the vreg file.
    NB = N if N <= max_images_per_step else max_images_per_step
    n_blocks = pl.cdiv(N, NB)
    n_pad = n_blocks * NB

    # Lane-dense, channel-major layout (C, N, H*W) for the HBM-facing arrays.
    xt = jnp.transpose(jnp.reshape(x, (N, C, HW)), (1, 0, 2))
    if n_pad != N:
        xt = jnp.pad(xt, ((0, 0), (0, n_pad - N), (0, 0)))

    kernel = functools.partial(_residual_block_kernel, H=H, W=W, C=C)
    smem_spec = pl.BlockSpec(memory_space=pltpu.MemorySpace.SMEM)

    out_t = pl.pallas_call(
        kernel,
        out_shape=jax.ShapeDtypeStruct((C, n_pad, HW), jnp.float32),
        grid=(n_blocks,),
        in_specs=[
            pl.BlockSpec((C, NB, HW), lambda n: (0, n, 0)),   # x (batch block)
            pl.BlockSpec((9, HW), lambda n: (0, 0)),          # tap masks
            smem_spec,                                        # w1 (flat OIHW)
            smem_spec,                                        # b1
            smem_spec,                                        # w2 (flat OIHW)
            smem_spec,                                        # b2
        ],
        out_specs=pl.BlockSpec((C, NB, HW), lambda n: (0, n, 0)),
        compiler_params=pltpu.CompilerParams(
            dimension_semantics=("parallel",),
            vmem_limit_bytes=32 * 1024 * 1024,
        ),
    )(xt, _tap_masks(H, W),
      w1.reshape(-1).astype(jnp.float32), b1.astype(jnp.float32),
      w2.reshape(-1).astype(jnp.float32), b2.astype(jnp.float32))

    out = jnp.transpose(out_t[:, :N, :], (1, 0, 2))
    return jnp.reshape(out, (N, C, H, W))


def _reference(x, w1, b1, w2, b2):
    dn = ("NCHW", "OIHW", "NCHW")
    c1 = jax.lax.conv_general_dilated(x, w1, (1, 1), "SAME", dimension_numbers=dn)
    r1 = jnp.maximum(c1 + b1[None, :, None, None], 0.0)
    c2 = jax.lax.conv_general_dilated(r1, w2, (1, 1), "SAME", dimension_numbers=dn)
    return jnp.maximum(c2 + b2[None, :, None, None], 0.0) + x


if __name__ == "__main__":
    key = jax.random.PRNGKey(0)
    k_x, k_w1, k_b1, k_w2, k_b2 = jax.random.split(key, 5)

    N, C, H, W = 2, 3, 16, 16            # module fixes in/out channels = 3
    x = jax.random.normal(k_x, (N, C, H, W), dtype=jnp.float32)

    # Deterministic parameter init (conv weights OIHW, as in nn.Conv2d(3,3,3)).
    w1 = jax.random.normal(k_w1, (C, C, 3, 3), dtype=jnp.float32) * 0.1
    b1 = jax.random.normal(k_b1, (C,), dtype=jnp.float32) * 0.1
    w2 = jax.random.normal(k_w2, (C, C, 3, 3), dtype=jnp.float32) * 0.1
    b2 = jax.random.normal(k_b2, (C,), dtype=jnp.float32) * 0.1

    out = jax.jit(simple_residual_block)(x, w1, b1, w2, b2)
    out = jax.block_until_ready(out)

    ref = _reference(x, w1, b1, w2, b2)
    np.testing.assert_allclose(np.asarray(out), np.asarray(ref), rtol=1e-5, atol=1e-5)

    print("KERNEL_OK")
</pallas_src>

<mosaic_0001>
module attributes {stable_mosaic.version = 11 : i64} {
  func.func @_residual_block_kernel(%arg0: i32, %arg1: memref<3x2x256xf32, #tpu.memory_space<vmem>>, %arg2: memref<9x256xf32, #tpu.memory_space<vmem>>, %arg3: memref<81xf32, #tpu.memory_space<smem>>, %arg4: memref<3xf32, #tpu.memory_space<smem>>, %arg5: memref<81xf32, #tpu.memory_space<smem>>, %arg6: memref<3xf32, #tpu.memory_space<smem>>, %arg7: memref<3x2x256xf32, #tpu.memory_space<vmem>>) attributes {dimension_semantics = [#tpu.dimension_semantics<parallel>], iteration_bounds = array<i64: 1>, scalar_prefetch = 0 : i64, scratch_operands = 0 : i64, tpu.core_type = #tpu.core_type<tc>, window_params = [{transform_indices = @transform_0, window_bounds = array<i64: 3, 2, 256>}, {pipeline_mode = #tpu.pipeline_mode<synchronous>, transform_indices = @transform_1, window_bounds = array<i64: 9, 256>}, {transform_indices = @transform_2, window_bounds = array<i64: 81>}, {transform_indices = @transform_3, window_bounds = array<i64: 3>}, {transform_indices = @transform_4, window_bounds = array<i64: 81>}, {transform_indices = @transform_5, window_bounds = array<i64: 3>}, {transform_indices = @transform_6, window_bounds = array<i64: 3, 2, 256>}]} {
    %c0 = arith.constant 0 : index
    %c0_0 = arith.constant 0 : index
    %c0_1 = arith.constant 0 : index
    %0 = vector.load %arg1[%c0, %c0_0, %c0_1] : memref<3x2x256xf32, #tpu.memory_space<vmem>>, vector<1x2x256xf32>
    %1 = vector.shape_cast %0 : vector<1x2x256xf32> to vector<2x256xf32>
    %c1 = arith.constant 1 : index
    %c0_2 = arith.constant 0 : index
    %c0_3 = arith.constant 0 : index
    %2 = vector.load %arg1[%c1, %c0_2, %c0_3] : memref<3x2x256xf32, #tpu.memory_space<vmem>>, vector<1x2x256xf32>
    %3 = vector.shape_cast %2 : vector<1x2x256xf32> to vector<2x256xf32>
    %c2 = arith.constant 2 : index
    %c0_4 = arith.constant 0 : index
    %c0_5 = arith.constant 0 : index
    %4 = vector.load %arg1[%c2, %c0_4, %c0_5] : memref<3x2x256xf32, #tpu.memory_space<vmem>>, vector<1x2x256xf32>
    %5 = vector.shape_cast %4 : vector<1x2x256xf32> to vector<2x256xf32>
    %cst = arith.constant 0.000000e+00 : f32
    %6 = vector.broadcast %cst : f32 to vector<2x256xf32>
    %c0_6 = arith.constant 0 : index
    %7 = memref.load %arg4[%c0_6] : memref<3xf32, #tpu.memory_space<smem>>
    %8 = vector.broadcast %7 : f32 to vector<2x256xf32>
    %9 = arith.addf %6, %8 : vector<2x256xf32>
    %cst_7 = arith.constant 0.000000e+00 : f32
    %10 = vector.broadcast %cst_7 : f32 to vector<2x256xf32>
    %c1_8 = arith.constant 1 : index
    %11 = memref.load %arg4[%c1_8] : memref<3xf32, #tpu.memory_space<smem>>
    %12 = vector.broadcast %11 : f32 to vector<2x256xf32>
    %13 = arith.addf %10, %12 : vector<2x256xf32>
    %cst_9 = arith.constant 0.000000e+00 : f32
    %14 = vector.broadcast %cst_9 : f32 to vector<2x256xf32>
    %c2_10 = arith.constant 2 : index
    %15 = memref.load %arg4[%c2_10] : memref<3xf32, #tpu.memory_space<smem>>
    %16 = vector.broadcast %15 : f32 to vector<2x256xf32>
    %17 = arith.addf %14, %16 : vector<2x256xf32>
    %c0_11 = arith.constant 0 : index
    %c0_12 = arith.constant 0 : index
    %18 = vector.load %arg2[%c0_11, %c0_12] : memref<9x256xf32, #tpu.memory_space<vmem>>, vector<1x256xf32>
    %19 = vector.shape_cast %18 : vector<1x256xf32> to vector<256xf32>
    %20 = vector.shape_cast %19 : vector<256xf32> to vector<1x256xf32>
    %21 = vector.broadcast %20 : vector<1x256xf32> to vector<2x256xf32>
    %c17_i32 = arith.constant 17 : i32
    %22 = tpu.dynamic_rotate %1 by %c17_i32 dim 1 : vector<2x256xf32>, i32 -> vector<2x256xf32>
    %23 = arith.mulf %22, %21 : vector<2x256xf32>
    %c0_13 = arith.constant 0 : index
    %24 = memref.load %arg3[%c0_13] : memref<81xf32, #tpu.memory_space<smem>>
    %25 = vector.broadcast %24 : f32 to vector<2x256xf32>
    %26 = arith.mulf %23, %25 : vector<2x256xf32>
    %27 = arith.addf %9, %26 : vector<2x256xf32>
    %c27 = arith.constant 27 : index
    %28 = memref.load %arg3[%c27] : memref<81xf32, #tpu.memory_space<smem>>
    %29 = vector.broadcast %28 : f32 to vector<2x256xf32>
    %30 = arith.mulf %23, %29 : vector<2x256xf32>
    %31 = arith.addf %13, %30 : vector<2x256xf32>
    %c54 = arith.constant 54 : index
    %32 = memref.load %arg3[%c54] : memref<81xf32, #tpu.memory_space<smem>>
    %33 = vector.broadcast %32 : f32 to vector<2x256xf32>
    %34 = arith.mulf %23, %33 : vector<2x256xf32>
    %35 = arith.addf %17, %34 : vector<2x256xf32>
    %c17_i32_14 = arith.constant 17 : i32
    %36 = tpu.dynamic_rotate %3 by %c17_i32_14 dim 1 : vector<2x256xf32>, i32 -> vector<2x256xf32>
    %37 = arith.mulf %36, %21 : vector<2x256xf32>
    %c9 = arith.constant 9 : index
    %38 = memref.load %arg3[%c9] : memref<81xf32, #tpu.memory_space<smem>>
    %39 = vector.broadcast %38 : f32 to vector<2x256xf32>
    %40 = arith.mulf %37, %39 : vector<2x256xf32>
    %41 = arith.addf %27, %40 : vector<2x256xf32>
    %c36 = arith.constant 36 : index
    %42 = memref.load %arg3[%c36] : memref<81xf32, #tpu.memory_space<smem>>
    %43 = vector.broadcast %42 : f32 to vector<2x256xf32>
    %44 = arith.mulf %37, %43 : vector<2x256xf32>
    %45 = arith.addf %31, %44 : vector<2x256xf32>
    %c63 = arith.constant 63 : index
    %46 = memref.load %arg3[%c63] : memref<81xf32, #tpu.memory_space<smem>>
    %47 = vector.broadcast %46 : f32 to vector<2x256xf32>
    %48 = arith.mulf %37, %47 : vector<2x256xf32>
    %49 = arith.addf %35, %48 : vector<2x256xf32>
    %c17_i32_15 = arith.constant 17 : i32
    %50 = tpu.dynamic_rotate %5 by %c17_i32_15 dim 1 : vector<2x256xf32>, i32 -> vector<2x256xf32>
    %51 = arith.mulf %50, %21 : vector<2x256xf32>
    %c18 = arith.constant 18 : index
    %52 = memref.load %arg3[%c18] : memref<81xf32, #tpu.memory_space<smem>>
    %53 = vector.broadcast %52 : f32 to vector<2x256xf32>
    %54 = arith.mulf %51, %53 : vector<2x256xf32>
    %55 = arith.addf %41, %54 : vector<2x256xf32>
    %c45 = arith.constant 45 : index
    %56 = memref.load %arg3[%c45] : memref<81xf32, #tpu.memory_space<smem>>
    %57 = vector.broadcast %56 : f32 to vector<2x256xf32>
    %58 = arith.mulf %51, %57 : vector<2x256xf32>
    %59 = arith.addf %45, %58 : vector<2x256xf32>
    %c72 = arith.constant 72 : index
    %60 = memref.load %arg3[%c72] : memref<81xf32, #tpu.memory_space<smem>>
    %61 = vector.broadcast %60 : f32 to vector<2x256xf32>
    %62 = arith.mulf %51, %61 : vector<2x256xf32>
    %63 = arith.addf %49, %62 : vector<2x256xf32>
    %c1_16 = arith.constant 1 : index
    %c0_17 = arith.constant 0 : index
    %64 = vector.load %arg2[%c1_16, %c0_17] : memref<9x256xf32, #tpu.memory_space<vmem>>, vector<1x256xf32>
    %65 = vector.shape_cast %64 : vector<1x256xf32> to vector<256xf32>
    %66 = vector.shape_cast %65 : vector<256xf32> to vector<1x256xf32>
    %67 = vector.broadcast %66 : vector<1x256xf32> to vector<2x256xf32>
    %c16_i32 = arith.constant 16 : i32
    %68 = tpu.dynamic_rotate %1 by %c16_i32 dim 1 : vector<2x256xf32>, i32 -> vector<2x256xf32>
    %69 = arith.mulf %68, %67 : vector<2x256xf32>
    %c1_18 = arith.constant 1 : index
    %70 = memref.load %arg3[%c1_18] : memref<81xf32, #tpu.memory_space<smem>>
    %71 = vector.broadcast %70 : f32 to vector<2x256xf32>
    %72 = arith.mulf %69, %71 : vector<2x256xf32>
    %73 = arith.addf %55, %72 : vector<2x256xf32>
    %c28 = arith.constant 28 : index
    %74 = memref.load %arg3[%c28] : memref<81xf32, #tpu.memory_space<smem>>
    %75 = vector.broadcast %74 : f32 to vector<2x256xf32>
    %76 = arith.mulf %69, %75 : vector<2x256xf32>
    %77 = arith.addf %59, %76 : vector<2x256xf32>
    %c55 = arith.constant 55 : index
    %78 = memref.load %arg3[%c55] : memref<81xf32, #tpu.memory_space<smem>>
    %79 = vector.broadcast %78 : f32 to vector<2x256xf32>
    %80 = arith.mulf %69, %79 : vector<2x256xf32>
    %81 = arith.addf %63, %80 : vector<2x256xf32>
    %c16_i32_19 = arith.constant 16 : i32
    %82 = tpu.dynamic_rotate %3 by %c16_i32_19 dim 1 : vector<2x256xf32>, i32 -> vector<2x256xf32>
    %83 = arith.mulf %82, %67 : vector<2x256xf32>
    %c10 = arith.constant 10 : index
    %84 = memref.load %arg3[%c10] : memref<81xf32, #tpu.memory_space<smem>>
    %85 = vector.broadcast %84 : f32 to vector<2x256xf32>
    %86 = arith.mulf %83, %85 : vector<2x256xf32>
    %87 = arith.addf %73, %86 : vector<2x256xf32>
    %c37 = arith.constant 37 : index
    %88 = memref.load %arg3[%c37] : memref<81xf32, #tpu.memory_space<smem>>
    %89 = vector.broadcast %88 : f32 to vector<2x256xf32>
    %90 = arith.mulf %83, %89 : vector<2x256xf32>
    %91 = arith.addf %77, %90 : vector<2x256xf32>
    %c64 = arith.constant 64 : index
    %92 = memref.load %arg3[%c64] : memref<81xf32, #tpu.memory_space<smem>>
    %93 = vector.broadcast %92 : f32 to vector<2x256xf32>
    %94 = arith.mulf %83, %93 : vector<2x256xf32>
    %95 = arith.addf %81, %94 : vector<2x256xf32>
    %c16_i32_20 = arith.constant 16 : i32
    %96 = tpu.dynamic_rotate %5 by %c16_i32_20 dim 1 : vector<2x256xf32>, i32 -> vector<2x256xf32>
    %97 = arith.mulf %96, %67 : vector<2x256xf32>
    %c19 = arith.constant 19 : index
    %98 = memref.load %arg3[%c19] : memref<81xf32, #tpu.memory_space<smem>>
    %99 = vector.broadcast %98 : f32 to vector<2x256xf32>
    %100 = arith.mulf %97, %99 : vector<2x256xf32>
    %101 = arith.addf %87, %100 : vector<2x256xf32>
    %c46 = arith.constant 46 : index
    %102 = memref.load %arg3[%c46] : memref<81xf32, #tpu.memory_space<smem>>
    %103 = vector.broadcast %102 : f32 to vector<2x256xf32>
    %104 = arith.mulf %97, %103 : vector<2x256xf32>
    %105 = arith.addf %91, %104 : vector<2x256xf32>
    %c73 = arith.constant 73 : index
    %106 = memref.load %arg3[%c73] : memref<81xf32, #tpu.memory_space<smem>>
    %107 = vector.broadcast %106 : f32 to vector<2x256xf32>
    %108 = arith.mulf %97, %107 : vector<2x256xf32>
    %109 = arith.addf %95, %108 : vector<2x256xf32>
    %c2_21 = arith.constant 2 : index
    %c0_22 = arith.constant 0 : index
    %110 = vector.load %arg2[%c2_21, %c0_22] : memref<9x256xf32, #tpu.memory_space<vmem>>, vector<1x256xf32>
    %111 = vector.shape_cast %110 : vector<1x256xf32> to vector<256xf32>
    %112 = vector.shape_cast %111 : vector<256xf32> to vector<1x256xf32>
    %113 = vector.broadcast %112 : vector<1x256xf32> to vector<2x256xf32>
    %c15_i32 = arith.constant 15 : i32
    %114 = tpu.dynamic_rotate %1 by %c15_i32 dim 1 : vector<2x256xf32>, i32 -> vector<2x256xf32>
    %115 = arith.mulf %114, %113 : vector<2x256xf32>
    %c2_23 = arith.constant 2 : index
    %116 = memref.load %arg3[%c2_23] : memref<81xf32, #tpu.memory_space<smem>>
    %117 = vector.broadcast %116 : f32 to vector<2x256xf32>
    %118 = arith.mulf %115, %117 : vector<2x256xf32>
    %119 = arith.addf %101, %118 : vector<2x256xf32>
    %c29 = arith.constant 29 : index
    %120 = memref.load %arg3[%c29] : memref<81xf32, #tpu.memory_space<smem>>
    %121 = vector.broadcast %120 : f32 to vector<2x256xf32>
    %122 = arith.mulf %115, %121 : vector<2x256xf32>
    %123 = arith.addf %105, %122 : vector<2x256xf32>
    %c56 = arith.constant 56 : index
    %124 = memref.load %arg3[%c56] : memref<81xf32, #tpu.memory_space<smem>>
    %125 = vector.broadcast %124 : f32 to vector<2x256xf32>
    %126 = arith.mulf %115, %125 : vector<2x256xf32>
    %127 = arith.addf %109, %126 : vector<2x256xf32>
    %c15_i32_24 = arith.constant 15 : i32
    %128 = tpu.dynamic_rotate %3 by %c15_i32_24 dim 1 : vector<2x256xf32>, i32 -> vector<2x256xf32>
    %129 = arith.mulf %128, %113 : vector<2x256xf32>
    %c11 = arith.constant 11 : index
    %130 = memref.load %arg3[%c11] : memref<81xf32, #tpu.memory_space<smem>>
    %131 = vector.broadcast %130 : f32 to vector<2x256xf32>
    %132 = arith.mulf %129, %131 : vector<2x256xf32>
    %133 = arith.addf %119, %132 : vector<2x256xf32>
    %c38 = arith.constant 38 : index
    %134 = memref.load %arg3[%c38] : memref<81xf32, #tpu.memory_space<smem>>
    %135 = vector.broadcast %134 : f32 to vector<2x256xf32>
    %136 = arith.mulf %129, %135 : vector<2x256xf32>
    %137 = arith.addf %123, %136 : vector<2x256xf32>
    %c65 = arith.constant 65 : index
    %138 = memref.load %arg3[%c65] : memref<81xf32, #tpu.memory_space<smem>>
    %139 = vector.broadcast %138 : f32 to vector<2x256xf32>
    %140 = arith.mulf %129, %139 : vector<2x256xf32>
    %141 = arith.addf %127, %140 : vector<2x256xf32>
    %c15_i32_25 = arith.constant 15 : i32
    %142 = tpu.dynamic_rotate %5 by %c15_i32_25 dim 1 : vector<2x256xf32>, i32 -> vector<2x256xf32>
    %143 = arith.mulf %142, %113 : vector<2x256xf32>
    %c20 = arith.constant 20 : index
    %144 = memref.load %arg3[%c20] : memref<81xf32, #tpu.memory_space<smem>>
    %145 = vector.broadcast %144 : f32 to vector<2x256xf32>
    %146 = arith.mulf %143, %145 : vector<2x256xf32>
    %147 = arith.addf %133, %146 : vector<2x256xf32>
    %c47 = arith.constant 47 : index
    %148 = memref.load %arg3[%c47] : memref<81xf32, #tpu.memory_space<smem>>
    %149 = vector.broadcast %148 : f32 to vector<2x256xf32>
    %150 = arith.mulf %143, %149 : vector<2x256xf32>
    %151 = arith.addf %137, %150 : vector<2x256xf32>
    %c74 = arith.constant 74 : index
    %152 = memref.load %arg3[%c74] : memref<81xf32, #tpu.memory_space<smem>>
    %153 = vector.broadcast %152 : f32 to vector<2x256xf32>
    %154 = arith.mulf %143, %153 : vector<2x256xf32>
    %155 = arith.addf %141, %154 : vector<2x256xf32>
    %c3 = arith.constant 3 : index
    %c0_26 = arith.constant 0 : index
    %156 = vector.load %arg2[%c3, %c0_26] : memref<9x256xf32, #tpu.memory_space<vmem>>, vector<1x256xf32>
    %157 = vector.shape_cast %156 : vector<1x256xf32> to vector<256xf32>
    %158 = vector.shape_cast %157 : vector<256xf32> to vector<1x256xf32>
    %159 = vector.broadcast %158 : vector<1x256xf32> to vector<2x256xf32>
    %c1_i32 = arith.constant 1 : i32
    %160 = tpu.dynamic_rotate %1 by %c1_i32 dim 1 : vector<2x256xf32>, i32 -> vector<2x256xf32>
    %161 = arith.mulf %160, %159 : vector<2x256xf32>
    %c3_27 = arith.constant 3 : index
    %162 = memref.load %arg3[%c3_27] : memref<81xf32, #tpu.memory_space<smem>>
    %163 = vector.broadcast %162 : f32 to vector<2x256xf32>
    %164 = arith.mulf %161, %163 : vector<2x256xf32>
    %165 = arith.addf %147, %164 : vector<2x256xf32>
    %c30 = arith.constant 30 : index
    %166 = memref.load %arg3[%c30] : memref<81xf32, #tpu.memory_space<smem>>
    %167 = vector.broadcast %166 : f32 to vector<2x256xf32>
    %168 = arith.mulf %161, %167 : vector<2x256xf32>
    %169 = arith.addf %151, %168 : vector<2x256xf32>
    %c57 = arith.constant 57 : index
    %170 = memref.load %arg3[%c57] : memref<81xf32, #tpu.memory_space<smem>>
    %171 = vector.broadcast %170 : f32 to vector<2x256xf32>
    %172 = arith.mulf %161, %171 : vector<2x256xf32>
    %173 = arith.addf %155, %172 : vector<2x256xf32>
    %c1_i32_28 = arith.constant 1 : i32
    %174 = tpu.dynamic_rotate %3 by %c1_i32_28 dim 1 : vector<2x256xf32>, i32 -> vector<2x256xf32>
    %175 = arith.mulf %174, %159 : vector<2x256xf32>
    %c12 = arith.constant 12 : index
    %176 = memref.load %arg3[%c12] : memref<81xf32, #tpu.memory_space<smem>>
    %177 = vector.broadcast %176 : f32 to vector<2x256xf32>
    %178 = arith.mulf %175, %177 : vector<2x256xf32>
    %179 = arith.addf %165, %178 : vector<2x256xf32>
    %c39 = arith.constant 39 : index
    %180 = memref.load %arg3[%c39] : memref<81xf32, #tpu.memory_space<smem>>
    %181 = vector.broadcast %180 : f32 to vector<2x256xf32>
    %182 = arith.mulf %175, %181 : vector<2x256xf32>
    %183 = arith.addf %169, %182 : vector<2x256xf32>
    %c66 = arith.constant 66 : index
    %184 = memref.load %arg3[%c66] : memref<81xf32, #tpu.memory_space<smem>>
    %185 = vector.broadcast %184 : f32 to vector<2x256xf32>
    %186 = arith.mulf %175, %185 : vector<2x256xf32>
    %187 = arith.addf %173, %186 : vector<2x256xf32>
    %c1_i32_29 = arith.constant 1 : i32
    %188 = tpu.dynamic_rotate %5 by %c1_i32_29 dim 1 : vector<2x256xf32>, i32 -> vector<2x256xf32>
    %189 = arith.mulf %188, %159 : vector<2x256xf32>
    %c21 = arith.constant 21 : index
    %190 = memref.load %arg3[%c21] : memref<81xf32, #tpu.memory_space<smem>>
    %191 = vector.broadcast %190 : f32 to vector<2x256xf32>
    %192 = arith.mulf %189, %191 : vector<2x256xf32>
    %193 = arith.addf %179, %192 : vector<2x256xf32>
    %c48 = arith.constant 48 : index
    %194 = memref.load %arg3[%c48] : memref<81xf32, #tpu.memory_space<smem>>
    %195 = vector.broadcast %194 : f32 to vector<2x256xf32>
    %196 = arith.mulf %189, %195 : vector<2x256xf32>
    %197 = arith.addf %183, %196 : vector<2x256xf32>
    %c75 = arith.constant 75 : index
    %198 = memref.load %arg3[%c75] : memref<81xf32, #tpu.memory_space<smem>>
    %199 = vector.broadcast %198 : f32 to vector<2x256xf32>
    %200 = arith.mulf %189, %199 : vector<2x256xf32>
    %201 = arith.addf %187, %200 : vector<2x256xf32>
    %c4 = arith.constant 4 : index
    %202 = memref.load %arg3[%c4] : memref<81xf32, #tpu.memory_space<smem>>
    %203 = vector.broadcast %202 : f32 to vector<2x256xf32>
    %204 = arith.mulf %1, %203 : vector<2x256xf32>
    %205 = arith.addf %193, %204 : vector<2x256xf32>
    %c31 = arith.constant 31 : index
    %206 = memref.load %arg3[%c31] : memref<81xf32, #tpu.memory_space<smem>>
    %207 = vector.broadcast %206 : f32 to vector<2x256xf32>
    %208 = arith.mulf %1, %207 : vector<2x256xf32>
    %209 = arith.addf %197, %208 : vector<2x256xf32>
    %c58 = arith.constant 58 : index
    %210 = memref.load %arg3[%c58] : memref<81xf32, #tpu.memory_space<smem>>
    %211 = vector.broadcast %210 : f32 to vector<2x256xf32>
    %212 = arith.mulf %1, %211 : vector<2x256xf32>
    %213 = arith.addf %201, %212 : vector<2x256xf32>
    %c13 = arith.constant 13 : index
    %214 = memref.load %arg3[%c13] : memref<81xf32, #tpu.memory_space<smem>>
    %215 = vector.broadcast %214 : f32 to vector<2x256xf32>
    %216 = arith.mulf %3, %215 : vector<2x256xf32>
    %217 = arith.addf %205, %216 : vector<2x256xf32>
    %c40 = arith.constant 40 : index
    %218 = memref.load %arg3[%c40] : memref<81xf32, #tpu.memory_space<smem>>
    %219 = vector.broadcast %218 : f32 to vector<2x256xf32>
    %220 = arith.mulf %3, %219 : vector<2x256xf32>
    %221 = arith.addf %209, %220 : vector<2x256xf32>
    %c67 = arith.constant 67 : index
    %222 = memref.load %arg3[%c67] : memref<81xf32, #tpu.memory_space<smem>>
    %223 = vector.broadcast %222 : f32 to vector<2x256xf32>
    %224 = arith.mulf %3, %223 : vector<2x256xf32>
    %225 = arith.addf %213, %224 : vector<2x256xf32>
    %c22 = arith.constant 22 : index
    %226 = memref.load %arg3[%c22] : memref<81xf32, #tpu.memory_space<smem>>
    %227 = vector.broadcast %226 : f32 to vector<2x256xf32>
    %228 = arith.mulf %5, %227 : vector<2x256xf32>
    %229 = arith.addf %217, %228 : vector<2x256xf32>
    %c49 = arith.constant 49 : index
    %230 = memref.load %arg3[%c49] : memref<81xf32, #tpu.memory_space<smem>>
    %231 = vector.broadcast %230 : f32 to vector<2x256xf32>
    %232 = arith.mulf %5, %231 : vector<2x256xf32>
    %233 = arith.addf %221, %232 : vector<2x256xf32>
    %c76 = arith.constant 76 : index
    %234 = memref.load %arg3[%c76] : memref<81xf32, #tpu.memory_space<smem>>
    %235 = vector.broadcast %234 : f32 to vector<2x256xf32>
    %236 = arith.mulf %5, %235 : vector<2x256xf32>
    %237 = arith.addf %225, %236 : vector<2x256xf32>
    %c5 = arith.constant 5 : index
    %c0_30 = arith.constant 0 : index
    %238 = vector.load %arg2[%c5, %c0_30] : memref<9x256xf32, #tpu.memory_space<vmem>>, vector<1x256xf32>
    %239 = vector.shape_cast %238 : vector<1x256xf32> to vector<256xf32>
    %240 = vector.shape_cast %239 : vector<256xf32> to vector<1x256xf32>
    %241 = vector.broadcast %240 : vector<1x256xf32> to vector<2x256xf32>
    %c255_i32 = arith.constant 255 : i32
    %242 = tpu.dynamic_rotate %1 by %c255_i32 dim 1 : vector<2x256xf32>, i32 -> vector<2x256xf32>
    %243 = arith.mulf %242, %241 : vector<2x256xf32>
    %c5_31 = arith.constant 5 : index
    %244 = memref.load %arg3[%c5_31] : memref<81xf32, #tpu.memory_space<smem>>
    %245 = vector.broadcast %244 : f32 to vector<2x256xf32>
    %246 = arith.mulf %243, %245 : vector<2x256xf32>
    %247 = arith.addf %229, %246 : vector<2x256xf32>
    %c32 = arith.constant 32 : index
    %248 = memref.load %arg3[%c32] : memref<81xf32, #tpu.memory_space<smem>>
    %249 = vector.broadcast %248 : f32 to vector<2x256xf32>
    %250 = arith.mulf %243, %249 : vector<2x256xf32>
    %251 = arith.addf %233, %250 : vector<2x256xf32>
    %c59 = arith.constant 59 : index
    %252 = memref.load %arg3[%c59] : memref<81xf32, #tpu.memory_space<smem>>
    %253 = vector.broadcast %252 : f32 to vector<2x256xf32>
    %254 = arith.mulf %243, %253 : vector<2x256xf32>
    %255 = arith.addf %237, %254 : vector<2x256xf32>
    %c255_i32_32 = arith.constant 255 : i32
    %256 = tpu.dynamic_rotate %3 by %c255_i32_32 dim 1 : vector<2x256xf32>, i32 -> vector<2x256xf32>
    %257 = arith.mulf %256, %241 : vector<2x256xf32>
    %c14 = arith.constant 14 : index
    %258 = memref.load %arg3[%c14] : memref<81xf32, #tpu.memory_space<smem>>
    %259 = vector.broadcast %258 : f32 to vector<2x256xf32>
    %260 = arith.mulf %257, %259 : vector<2x256xf32>
    %261 = arith.addf %247, %260 : vector<2x256xf32>
    %c41 = arith.constant 41 : index
    %262 = memref.load %arg3[%c41] : memref<81xf32, #tpu.memory_space<smem>>
    %263 = vector.broadcast %262 : f32 to vector<2x256xf32>
    %264 = arith.mulf %257, %263 : vector<2x256xf32>
    %265 = arith.addf %251, %264 : vector<2x256xf32>
    %c68 = arith.constant 68 : index
    %266 = memref.load %arg3[%c68] : memref<81xf32, #tpu.memory_space<smem>>
    %267 = vector.broadcast %266 : f32 to vector<2x256xf32>
    %268 = arith.mulf %257, %267 : vector<2x256xf32>
    %269 = arith.addf %255, %268 : vector<2x256xf32>
    %c255_i32_33 = arith.constant 255 : i32
    %270 = tpu.dynamic_rotate %5 by %c255_i32_33 dim 1 : vector<2x256xf32>, i32 -> vector<2x256xf32>
    %271 = arith.mulf %270, %241 : vector<2x256xf32>
    %c23 = arith.constant 23 : index
    %272 = memref.load %arg3[%c23] : memref<81xf32, #tpu.memory_space<smem>>
    %273 = vector.broadcast %272 : f32 to vector<2x256xf32>
    %274 = arith.mulf %271, %273 : vector<2x256xf32>
    %275 = arith.addf %261, %274 : vector<2x256xf32>
    %c50 = arith.constant 50 : index
    %276 = memref.load %arg3[%c50] : memref<81xf32, #tpu.memory_space<smem>>
    %277 = vector.broadcast %276 : f32 to vector<2x256xf32>
    %278 = arith.mulf %271, %277 : vector<2x256xf32>
    %279 = arith.addf %265, %278 : vector<2x256xf32>
    %c77 = arith.constant 77 : index
    %280 = memref.load %arg3[%c77] : memref<81xf32, #tpu.memory_space<smem>>
    %281 = vector.broadcast %280 : f32 to vector<2x256xf32>
    %282 = arith.mulf %271, %281 : vector<2x256xf32>
    %283 = arith.addf %269, %282 : vector<2x256xf32>
    %c6 = arith.constant 6 : index
    %c0_34 = arith.constant 0 : index
    %284 = vector.load %arg2[%c6, %c0_34] : memref<9x256xf32, #tpu.memory_space<vmem>>, vector<1x256xf32>
    %285 = vector.shape_cast %284 : vector<1x256xf32> to vector<256xf32>
    %286 = vector.shape_cast %285 : vector<256xf32> to vector<1x256xf32>
    %287 = vector.broadcast %286 : vector<1x256xf32> to vector<2x256xf32>
    %c241_i32 = arith.constant 241 : i32
    %288 = tpu.dynamic_rotate %1 by %c241_i32 dim 1 : vector<2x256xf32>, i32 -> vector<2x256xf32>
    %289 = arith.mulf %288, %287 : vector<2x256xf32>
    %c6_35 = arith.constant 6 : index
    %290 = memref.load %arg3[%c6_35] : memref<81xf32, #tpu.memory_space<smem>>
    %291 = vector.broadcast %290 : f32 to vector<2x256xf32>
    %292 = arith.mulf %289, %291 : vector<2x256xf32>
    %293 = arith.addf %275, %292 : vector<2x256xf32>
    %c33 = arith.constant 33 : index
    %294 = memref.load %arg3[%c33] : memref<81xf32, #tpu.memory_space<smem>>
    %295 = vector.broadcast %294 : f32 to vector<2x256xf32>
    %296 = arith.mulf %289, %295 : vector<2x256xf32>
    %297 = arith.addf %279, %296 : vector<2x256xf32>
    %c60 = arith.constant 60 : index
    %298 = memref.load %arg3[%c60] : memref<81xf32, #tpu.memory_space<smem>>
    %299 = vector.broadcast %298 : f32 to vector<2x256xf32>
    %300 = arith.mulf %289, %299 : vector<2x256xf32>
    %301 = arith.addf %283, %300 : vector<2x256xf32>
    %c241_i32_36 = arith.constant 241 : i32
    %302 = tpu.dynamic_rotate %3 by %c241_i32_36 dim 1 : vector<2x256xf32>, i32 -> vector<2x256xf32>
    %303 = arith.mulf %302, %287 : vector<2x256xf32>
    %c15 = arith.constant 15 : index
    %304 = memref.load %arg3[%c15] : memref<81xf32, #tpu.memory_space<smem>>
    %305 = vector.broadcast %304 : f32 to vector<2x256xf32>
    %306 = arith.mulf %303, %305 : vector<2x256xf32>
    %307 = arith.addf %293, %306 : vector<2x256xf32>
    %c42 = arith.constant 42 : index
    %308 = memref.load %arg3[%c42] : memref<81xf32, #tpu.memory_space<smem>>
    %309 = vector.broadcast %308 : f32 to vector<2x256xf32>
    %310 = arith.mulf %303, %309 : vector<2x256xf32>
    %311 = arith.addf %297, %310 : vector<2x256xf32>
    %c69 = arith.constant 69 : index
    %312 = memref.load %arg3[%c69] : memref<81xf32, #tpu.memory_space<smem>>
    %313 = vector.broadcast %312 : f32 to vector<2x256xf32>
    %314 = arith.mulf %303, %313 : vector<2x256xf32>
    %315 = arith.addf %301, %314 : vector<2x256xf32>
    %c241_i32_37 = arith.constant 241 : i32
    %316 = tpu.dynamic_rotate %5 by %c241_i32_37 dim 1 : vector<2x256xf32>, i32 -> vector<2x256xf32>
    %317 = arith.mulf %316, %287 : vector<2x256xf32>
    %c24 = arith.constant 24 : index
    %318 = memref.load %arg3[%c24] : memref<81xf32, #tpu.memory_space<smem>>
    %319 = vector.broadcast %318 : f32 to vector<2x256xf32>
    %320 = arith.mulf %317, %319 : vector<2x256xf32>
    %321 = arith.addf %307, %320 : vector<2x256xf32>
    %c51 = arith.constant 51 : index
    %322 = memref.load %arg3[%c51] : memref<81xf32, #tpu.memory_space<smem>>
    %323 = vector.broadcast %322 : f32 to vector<2x256xf32>
    %324 = arith.mulf %317, %323 : vector<2x256xf32>
    %325 = arith.addf %311, %324 : vector<2x256xf32>
    %c78 = arith.constant 78 : index
    %326 = memref.load %arg3[%c78] : memref<81xf32, #tpu.memory_space<smem>>
    %327 = vector.broadcast %326 : f32 to vector<2x256xf32>
    %328 = arith.mulf %317, %327 : vector<2x256xf32>
    %329 = arith.addf %315, %328 : vector<2x256xf32>
    %c7 = arith.constant 7 : index
    %c0_38 = arith.constant 0 : index
    %330 = vector.load %arg2[%c7, %c0_38] : memref<9x256xf32, #tpu.memory_space<vmem>>, vector<1x256xf32>
    %331 = vector.shape_cast %330 : vector<1x256xf32> to vector<256xf32>
    %332 = vector.shape_cast %331 : vector<256xf32> to vector<1x256xf32>
    %333 = vector.broadcast %332 : vector<1x256xf32> to vector<2x256xf32>
    %c240_i32 = arith.constant 240 : i32
    %334 = tpu.dynamic_rotate %1 by %c240_i32 dim 1 : vector<2x256xf32>, i32 -> vector<2x256xf32>
    %335 = arith.mulf %334, %333 : vector<2x256xf32>
    %c7_39 = arith.constant 7 : index
    %336 = memref.load %arg3[%c7_39] : memref<81xf32, #tpu.memory_space<smem>>
    %337 = vector.broadcast %336 : f32 to vector<2x256xf32>
    %338 = arith.mulf %335, %337 : vector<2x256xf32>
    %339 = arith.addf %321, %338 : vector<2x256xf32>
    %c34 = arith.constant 34 : index
    %340 = memref.load %arg3[%c34] : memref<81xf32, #tpu.memory_space<smem>>
    %341 = vector.broadcast %340 : f32 to vector<2x256xf32>
    %342 = arith.mulf %335, %341 : vector<2x256xf32>
    %343 = arith.addf %325, %342 : vector<2x256xf32>
    %c61 = arith.constant 61 : index
    %344 = memref.load %arg3[%c61] : memref<81xf32, #tpu.memory_space<smem>>
    %345 = vector.broadcast %344 : f32 to vector<2x256xf32>
    %346 = arith.mulf %335, %345 : vector<2x256xf32>
    %347 = arith.addf %329, %346 : vector<2x256xf32>
    %c240_i32_40 = arith.constant 240 : i32
    %348 = tpu.dynamic_rotate %3 by %c240_i32_40 dim 1 : vector<2x256xf32>, i32 -> vector<2x256xf32>
    %349 = arith.mulf %348, %333 : vector<2x256xf32>
    %c16 = arith.constant 16 : index
    %350 = memref.load %arg3[%c16] : memref<81xf32, #tpu.memory_space<smem>>
    %351 = vector.broadcast %350 : f32 to vector<2x256xf32>
    %352 = arith.mulf %349, %351 : vector<2x256xf32>
    %353 = arith.addf %339, %352 : vector<2x256xf32>
    %c43 = arith.constant 43 : index
    %354 = memref.load %arg3[%c43] : memref<81xf32, #tpu.memory_space<smem>>
    %355 = vector.broadcast %354 : f32 to vector<2x256xf32>
    %356 = arith.mulf %349, %355 : vector<2x256xf32>
    %357 = arith.addf %343, %356 : vector<2x256xf32>
    %c70 = arith.constant 70 : index
    %358 = memref.load %arg3[%c70] : memref<81xf32, #tpu.memory_space<smem>>
    %359 = vector.broadcast %358 : f32 to vector<2x256xf32>
    %360 = arith.mulf %349, %359 : vector<2x256xf32>
    %361 = arith.addf %347, %360 : vector<2x256xf32>
    %c240_i32_41 = arith.constant 240 : i32
    %362 = tpu.dynamic_rotate %5 by %c240_i32_41 dim 1 : vector<2x256xf32>, i32 -> vector<2x256xf32>
    %363 = arith.mulf %362, %333 : vector<2x256xf32>
    %c25 = arith.constant 25 : index
    %364 = memref.load %arg3[%c25] : memref<81xf32, #tpu.memory_space<smem>>
    %365 = vector.broadcast %364 : f32 to vector<2x256xf32>
    %366 = arith.mulf %363, %365 : vector<2x256xf32>
    %367 = arith.addf %353, %366 : vector<2x256xf32>
    %c52 = arith.constant 52 : index
    %368 = memref.load %arg3[%c52] : memref<81xf32, #tpu.memory_space<smem>>
    %369 = vector.broadcast %368 : f32 to vector<2x256xf32>
    %370 = arith.mulf %363, %369 : vector<2x256xf32>
    %371 = arith.addf %357, %370 : vector<2x256xf32>
    %c79 = arith.constant 79 : index
    %372 = memref.load %arg3[%c79] : memref<81xf32, #tpu.memory_space<smem>>
    %373 = vector.broadcast %372 : f32 to vector<2x256xf32>
    %374 = arith.mulf %363, %373 : vector<2x256xf32>
    %375 = arith.addf %361, %374 : vector<2x256xf32>
    %c8 = arith.constant 8 : index
    %c0_42 = arith.constant 0 : index
    %376 = vector.load %arg2[%c8, %c0_42] : memref<9x256xf32, #tpu.memory_space<vmem>>, vector<1x256xf32>
    %377 = vector.shape_cast %376 : vector<1x256xf32> to vector<256xf32>
    %378 = vector.shape_cast %377 : vector<256xf32> to vector<1x256xf32>
    %379 = vector.broadcast %378 : vector<1x256xf32> to vector<2x256xf32>
    %c239_i32 = arith.constant 239 : i32
    %380 = tpu.dynamic_rotate %1 by %c239_i32 dim 1 : vector<2x256xf32>, i32 -> vector<2x256xf32>
    %381 = arith.mulf %380, %379 : vector<2x256xf32>
    %c8_43 = arith.constant 8 : index
    %382 = memref.load %arg3[%c8_43] : memref<81xf32, #tpu.memory_space<smem>>
    %383 = vector.broadcast %382 : f32 to vector<2x256xf32>
    %384 = arith.mulf %381, %383 : vector<2x256xf32>
    %385 = arith.addf %367, %384 : vector<2x256xf32>
    %c35 = arith.constant 35 : index
    %386 = memref.load %arg3[%c35] : memref<81xf32, #tpu.memory_space<smem>>
    %387 = vector.broadcast %386 : f32 to vector<2x256xf32>
    %388 = arith.mulf %381, %387 : vector<2x256xf32>
    %389 = arith.addf %371, %388 : vector<2x256xf32>
    %c62 = arith.constant 62 : index
    %390 = memref.load %arg3[%c62] : memref<81xf32, #tpu.memory_space<smem>>
    %391 = vector.broadcast %390 : f32 to vector<2x256xf32>
    %392 = arith.mulf %381, %391 : vector<2x256xf32>
    %393 = arith.addf %375, %392 : vector<2x256xf32>
    %c239_i32_44 = arith.constant 239 : i32
    %394 = tpu.dynamic_rotate %3 by %c239_i32_44 dim 1 : vector<2x256xf32>, i32 -> vector<2x256xf32>
    %395 = arith.mulf %394, %379 : vector<2x256xf32>
    %c17 = arith.constant 17 : index
    %396 = memref.load %arg3[%c17] : memref<81xf32, #tpu.memory_space<smem>>
    %397 = vector.broadcast %396 : f32 to vector<2x256xf32>
    %398 = arith.mulf %395, %397 : vector<2x256xf32>
    %399 = arith.addf %385, %398 : vector<2x256xf32>
    %c44 = arith.constant 44 : index
    %400 = memref.load %arg3[%c44] : memref<81xf32, #tpu.memory_space<smem>>
    %401 = vector.broadcast %400 : f32 to vector<2x256xf32>
    %402 = arith.mulf %395, %401 : vector<2x256xf32>
    %403 = arith.addf %389, %402 : vector<2x256xf32>
    %c71 = arith.constant 71 : index
    %404 = memref.load %arg3[%c71] : memref<81xf32, #tpu.memory_space<smem>>
    %405 = vector.broadcast %404 : f32 to vector<2x256xf32>
    %406 = arith.mulf %395, %405 : vector<2x256xf32>
    %407 = arith.addf %393, %406 : vector<2x256xf32>
    %c239_i32_45 = arith.constant 239 : i32
    %408 = tpu.dynamic_rotate %5 by %c239_i32_45 dim 1 : vector<2x256xf32>, i32 -> vector<2x256xf32>
    %409 = arith.mulf %408, %379 : vector<2x256xf32>
    %c26 = arith.constant 26 : index
    %410 = memref.load %arg3[%c26] : memref<81xf32, #tpu.memory_space<smem>>
    %411 = vector.broadcast %410 : f32 to vector<2x256xf32>
    %412 = arith.mulf %409, %411 : vector<2x256xf32>
    %413 = arith.addf %399, %412 : vector<2x256xf32>
    %c53 = arith.constant 53 : index
    %414 = memref.load %arg3[%c53] : memref<81xf32, #tpu.memory_space<smem>>
    %415 = vector.broadcast %414 : f32 to vector<2x256xf32>
    %416 = arith.mulf %409, %415 : vector<2x256xf32>
    %417 = arith.addf %403, %416 : vector<2x256xf32>
    %c80 = arith.constant 80 : index
    %418 = memref.load %arg3[%c80] : memref<81xf32, #tpu.memory_space<smem>>
    %419 = vector.broadcast %418 : f32 to vector<2x256xf32>
    %420 = arith.mulf %409, %419 : vector<2x256xf32>
    %421 = arith.addf %407, %420 : vector<2x256xf32>
    %cst_46 = arith.constant 0.000000e+00 : f32
    %422 = vector.broadcast %cst_46 : f32 to vector<2x256xf32>
    %423 = arith.maximumf %413, %422 : vector<2x256xf32>
    %cst_47 = arith.constant 0.000000e+00 : f32
    %424 = vector.broadcast %cst_47 : f32 to vector<2x256xf32>
    %425 = arith.maximumf %417, %424 : vector<2x256xf32>
    %cst_48 = arith.constant 0.000000e+00 : f32
    %426 = vector.broadcast %cst_48 : f32 to vector<2x256xf32>
    %427 = arith.maximumf %421, %426 : vector<2x256xf32>
    %cst_49 = arith.constant 0.000000e+00 : f32
    %428 = vector.broadcast %cst_49 : f32 to vector<2x256xf32>
    %c0_50 = arith.constant 0 : index
    %429 = memref.load %arg6[%c0_50] : memref<3xf32, #tpu.memory_space<smem>>
    %430 = vector.broadcast %429 : f32 to vector<2x256xf32>
    %431 = arith.addf %428, %430 : vector<2x256xf32>
    %cst_51 = arith.constant 0.000000e+00 : f32
    %432 = vector.broadcast %cst_51 : f32 to vector<2x256xf32>
    %c1_52 = arith.constant 1 : index
    %433 = memref.load %arg6[%c1_52] : memref<3xf32, #tpu.memory_space<smem>>
    %434 = vector.broadcast %433 : f32 to vector<2x256xf32>
    %435 = arith.addf %432, %434 : vector<2x256xf32>
    %cst_53 = arith.constant 0.000000e+00 : f32
    %436 = vector.broadcast %cst_53 : f32 to vector<2x256xf32>
    %c2_54 = arith.constant 2 : index
    %437 = memref.load %arg6[%c2_54] : memref<3xf32, #tpu.memory_space<smem>>
    %438 = vector.broadcast %437 : f32 to vector<2x256xf32>
    %439 = arith.addf %436, %438 : vector<2x256xf32>
    %c0_55 = arith.constant 0 : index
    %c0_56 = arith.constant 0 : index
    %440 = vector.load %arg2[%c0_55, %c0_56] : memref<9x256xf32, #tpu.memory_space<vmem>>, vector<1x256xf32>
    %441 = vector.shape_cast %440 : vector<1x256xf32> to vector<256xf32>
    %442 = vector.shape_cast %441 : vector<256xf32> to vector<1x256xf32>
    %443 = vector.broadcast %442 : vector<1x256xf32> to vector<2x256xf32>
    %c17_i32_57 = arith.constant 17 : i32
    %444 = tpu.dynamic_rotate %423 by %c17_i32_57 dim 1 : vector<2x256xf32>, i32 -> vector<2x256xf32>
    %445 = arith.mulf %444, %443 : vector<2x256xf32>
    %c0_58 = arith.constant 0 : index
    %446 = memref.load %arg5[%c0_58] : memref<81xf32, #tpu.memory_space<smem>>
    %447 = vector.broadcast %446 : f32 to vector<2x256xf32>
    %448 = arith.mulf %445, %447 : vector<2x256xf32>
    %449 = arith.addf %431, %448 : vector<2x256xf32>
    %c27_59 = arith.constant 27 : index
    %450 = memref.load %arg5[%c27_59] : memref<81xf32, #tpu.memory_space<smem>>
    %451 = vector.broadcast %450 : f32 to vector<2x256xf32>
    %452 = arith.mulf %445, %451 : vector<2x256xf32>
    %453 = arith.addf %435, %452 : vector<2x256xf32>
    %c54_60 = arith.constant 54 : index
    %454 = memref.load %arg5[%c54_60] : memref<81xf32, #tpu.memory_space<smem>>
    %455 = vector.broadcast %454 : f32 to vector<2x256xf32>
    %456 = arith.mulf %445, %455 : vector<2x256xf32>
    %457 = arith.addf %439, %456 : vector<2x256xf32>
    %c17_i32_61 = arith.constant 17 : i32
    %458 = tpu.dynamic_rotate %425 by %c17_i32_61 dim 1 : vector<2x256xf32>, i32 -> vector<2x256xf32>
    %459 = arith.mulf %458, %443 : vector<2x256xf32>
    %c9_62 = arith.constant 9 : index
    %460 = memref.load %arg5[%c9_62] : memref<81xf32, #tpu.memory_space<smem>>
    %461 = vector.broadcast %460 : f32 to vector<2x256xf32>
    %462 = arith.mulf %459, %461 : vector<2x256xf32>
    %463 = arith.addf %449, %462 : vector<2x256xf32>
    %c36_63 = arith.constant 36 : index
    %464 = memref.load %arg5[%c36_63] : memref<81xf32, #tpu.memory_space<smem>>
    %465 = vector.broadcast %464 : f32 to vector<2x256xf32>
    %466 = arith.mulf %459, %465 : vector<2x256xf32>
    %467 = arith.addf %453, %466 : vector<2x256xf32>
    %c63_64 = arith.constant 63 : index
    %468 = memref.load %arg5[%c63_64] : memref<81xf32, #tpu.memory_space<smem>>
    %469 = vector.broadcast %468 : f32 to vector<2x256xf32>
    %470 = arith.mulf %459, %469 : vector<2x256xf32>
    %471 = arith.addf %457, %470 : vector<2x256xf32>
    %c17_i32_65 = arith.constant 17 : i32
    %472 = tpu.dynamic_rotate %427 by %c17_i32_65 dim 1 : vector<2x256xf32>, i32 -> vector<2x256xf32>
    %473 = arith.mulf %472, %443 : vector<2x256xf32>
    %c18_66 = arith.constant 18 : index
    %474 = memref.load %arg5[%c18_66] : memref<81xf32, #tpu.memory_space<smem>>
    %475 = vector.broadcast %474 : f32 to vector<2x256xf32>
    %476 = arith.mulf %473, %475 : vector<2x256xf32>
    %477 = arith.addf %463, %476 : vector<2x256xf32>
    %c45_67 = arith.constant 45 : index
    %478 = memref.load %arg5[%c45_67] : memref<81xf32, #tpu.memory_space<smem>>
    %479 = vector.broadcast %478 : f32 to vector<2x256xf32>
    %480 = arith.mulf %473, %479 : vector<2x256xf32>
    %481 = arith.addf %467, %480 : vector<2x256xf32>
    %c72_68 = arith.constant 72 : index
    %482 = memref.load %arg5[%c72_68] : memref<81xf32, #tpu.memory_space<smem>>
    %483 = vector.broadcast %482 : f32 to vector<2x256xf32>
    %484 = arith.mulf %473, %483 : vector<2x256xf32>
    %485 = arith.addf %471, %484 : vector<2x256xf32>
    %c1_69 = arith.constant 1 : index
    %c0_70 = arith.constant 0 : index
    %486 = vector.load %arg2[%c1_69, %c0_70] : memref<9x256xf32, #tpu.memory_space<vmem>>, vector<1x256xf32>
    %487 = vector.shape_cast %486 : vector<1x256xf32> to vector<256xf32>
    %488 = vector.shape_cast %487 : vector<256xf32> to vector<1x256xf32>
    %489 = vector.broadcast %488 : vector<1x256xf32> to vector<2x256xf32>
    %c16_i32_71 = arith.constant 16 : i32
    %490 = tpu.dynamic_rotate %423 by %c16_i32_71 dim 1 : vector<2x256xf32>, i32 -> vector<2x256xf32>
    %491 = arith.mulf %490, %489 : vector<2x256xf32>
    %c1_72 = arith.constant 1 : index
    %492 = memref.load %arg5[%c1_72] : memref<81xf32, #tpu.memory_space<smem>>
    %493 = vector.broadcast %492 : f32 to vector<2x256xf32>
    %494 = arith.mulf %491, %493 : vector<2x256xf32>
    %495 = arith.addf %477, %494 : vector<2x256xf32>
    %c28_73 = arith.constant 28 : index
    %496 = memref.load %arg5[%c28_73] : memref<81xf32, #tpu.memory_space<smem>>
    %497 = vector.broadcast %496 : f32 to vector<2x256xf32>
    %498 = arith.mulf %491, %497 : vector<2x256xf32>
    %499 = arith.addf %481, %498 : vector<2x256xf32>
    %c55_74 = arith.constant 55 : index
    %500 = memref.load %arg5[%c55_74] : memref<81xf32, #tpu.memory_space<smem>>
    %501 = vector.broadcast %500 : f32 to vector<2x256xf32>
    %502 = arith.mulf %491, %501 : vector<2x256xf32>
    %503 = arith.addf %485, %502 : vector<2x256xf32>
    %c16_i32_75 = arith.constant 16 : i32
    %504 = tpu.dynamic_rotate %425 by %c16_i32_75 dim 1 : vector<2x256xf32>, i32 -> vector<2x256xf32>
    %505 = arith.mulf %504, %489 : vector<2x256xf32>
    %c10_76 = arith.constant 10 : index
    %506 = memref.load %arg5[%c10_76] : memref<81xf32, #tpu.memory_space<smem>>
    %507 = vector.broadcast %506 : f32 to vector<2x256xf32>
    %508 = arith.mulf %505, %507 : vector<2x256xf32>
    %509 = arith.addf %495, %508 : vector<2x256xf32>
    %c37_77 = arith.constant 37 : index
    %510 = memref.load %arg5[%c37_77] : memref<81xf32, #tpu.memory_space<smem>>
    %511 = vector.broadcast %510 : f32 to vector<2x256xf32>
    %512 = arith.mulf %505, %511 : vector<2x256xf32>
    %513 = arith.addf %499, %512 : vector<2x256xf32>
    %c64_78 = arith.constant 64 : index
    %514 = memref.load %arg5[%c64_78] : memref<81xf32, #tpu.memory_space<smem>>
    %515 = vector.broadcast %514 : f32 to vector<2x256xf32>
    %516 = arith.mulf %505, %515 : vector<2x256xf32>
    %517 = arith.addf %503, %516 : vector<2x256xf32>
    %c16_i32_79 = arith.constant 16 : i32
    %518 = tpu.dynamic_rotate %427 by %c16_i32_79 dim 1 : vector<2x256xf32>, i32 -> vector<2x256xf32>
    %519 = arith.mulf %518, %489 : vector<2x256xf32>
    %c19_80 = arith.constant 19 : index
    %520 = memref.load %arg5[%c19_80] : memref<81xf32, #tpu.memory_space<smem>>
    %521 = vector.broadcast %520 : f32 to vector<2x256xf32>
    %522 = arith.mulf %519, %521 : vector<2x256xf32>
    %523 = arith.addf %509, %522 : vector<2x256xf32>
    %c46_81 = arith.constant 46 : index
    %524 = memref.load %arg5[%c46_81] : memref<81xf32, #tpu.memory_space<smem>>
    %525 = vector.broadcast %524 : f32 to vector<2x256xf32>
    %526 = arith.mulf %519, %525 : vector<2x256xf32>
    %527 = arith.addf %513, %526 : vector<2x256xf32>
    %c73_82 = arith.constant 73 : index
    %528 = memref.load %arg5[%c73_82] : memref<81xf32, #tpu.memory_space<smem>>
    %529 = vector.broadcast %528 : f32 to vector<2x256xf32>
    %530 = arith.mulf %519, %529 : vector<2x256xf32>
    %531 = arith.addf %517, %530 : vector<2x256xf32>
    %c2_83 = arith.constant 2 : index
    %c0_84 = arith.constant 0 : index
    %532 = vector.load %arg2[%c2_83, %c0_84] : memref<9x256xf32, #tpu.memory_space<vmem>>, vector<1x256xf32>
    %533 = vector.shape_cast %532 : vector<1x256xf32> to vector<256xf32>
    %534 = vector.shape_cast %533 : vector<256xf32> to vector<1x256xf32>
    %535 = vector.broadcast %534 : vector<1x256xf32> to vector<2x256xf32>
    %c15_i32_85 = arith.constant 15 : i32
    %536 = tpu.dynamic_rotate %423 by %c15_i32_85 dim 1 : vector<2x256xf32>, i32 -> vector<2x256xf32>
    %537 = arith.mulf %536, %535 : vector<2x256xf32>
    %c2_86 = arith.constant 2 : index
    %538 = memref.load %arg5[%c2_86] : memref<81xf32, #tpu.memory_space<smem>>
    %539 = vector.broadcast %538 : f32 to vector<2x256xf32>
    %540 = arith.mulf %537, %539 : vector<2x256xf32>
    %541 = arith.addf %523, %540 : vector<2x256xf32>
    %c29_87 = arith.constant 29 : index
    %542 = memref.load %arg5[%c29_87] : memref<81xf32, #tpu.memory_space<smem>>
    %543 = vector.broadcast %542 : f32 to vector<2x256xf32>
    %544 = arith.mulf %537, %543 : vector<2x256xf32>
    %545 = arith.addf %527, %544 : vector<2x256xf32>
    %c56_88 = arith.constant 56 : index
    %546 = memref.load %arg5[%c56_88] : memref<81xf32, #tpu.memory_space<smem>>
    %547 = vector.broadcast %546 : f32 to vector<2x256xf32>
    %548 = arith.mulf %537, %547 : vector<2x256xf32>
    %549 = arith.addf %531, %548 : vector<2x256xf32>
    %c15_i32_89 = arith.constant 15 : i32
    %550 = tpu.dynamic_rotate %425 by %c15_i32_89 dim 1 : vector<2x256xf32>, i32 -> vector<2x256xf32>
    %551 = arith.mulf %550, %535 : vector<2x256xf32>
    %c11_90 = arith.constant 11 : index
    %552 = memref.load %arg5[%c11_90] : memref<81xf32, #tpu.memory_space<smem>>
    %553 = vector.broadcast %552 : f32 to vector<2x256xf32>
    %554 = arith.mulf %551, %553 : vector<2x256xf32>
    %555 = arith.addf %541, %554 : vector<2x256xf32>
    %c38_91 = arith.constant 38 : index
    %556 = memref.load %arg5[%c38_91] : memref<81xf32, #tpu.memory_space<smem>>
    %557 = vector.broadcast %556 : f32 to vector<2x256xf32>
    %558 = arith.mulf %551, %557 : vector<2x256xf32>
    %559 = arith.addf %545, %558 : vector<2x256xf32>
    %c65_92 = arith.constant 65 : index
    %560 = memref.load %arg5[%c65_92] : memref<81xf32, #tpu.memory_space<smem>>
    %561 = vector.broadcast %560 : f32 to vector<2x256xf32>
    %562 = arith.mulf %551, %561 : vector<2x256xf32>
    %563 = arith.addf %549, %562 : vector<2x256xf32>
    %c15_i32_93 = arith.constant 15 : i32
    %564 = tpu.dynamic_rotate %427 by %c15_i32_93 dim 1 : vector<2x256xf32>, i32 -> vector<2x256xf32>
    %565 = arith.mulf %564, %535 : vector<2x256xf32>
    %c20_94 = arith.constant 20 : index
    %566 = memref.load %arg5[%c20_94] : memref<81xf32, #tpu.memory_space<smem>>
    %567 = vector.broadcast %566 : f32 to vector<2x256xf32>
    %568 = arith.mulf %565, %567 : vector<2x256xf32>
    %569 = arith.addf %555, %568 : vector<2x256xf32>
    %c47_95 = arith.constant 47 : index
    %570 = memref.load %arg5[%c47_95] : memref<81xf32, #tpu.memory_space<smem>>
    %571 = vector.broadcast %570 : f32 to vector<2x256xf32>
    %572 = arith.mulf %565, %571 : vector<2x256xf32>
    %573 = arith.addf %559, %572 : vector<2x256xf32>
    %c74_96 = arith.constant 74 : index
    %574 = memref.load %arg5[%c74_96] : memref<81xf32, #tpu.memory_space<smem>>
    %575 = vector.broadcast %574 : f32 to vector<2x256xf32>
    %576 = arith.mulf %565, %575 : vector<2x256xf32>
    %577 = arith.addf %563, %576 : vector<2x256xf32>
    %c3_97 = arith.constant 3 : index
    %c0_98 = arith.constant 0 : index
    %578 = vector.load %arg2[%c3_97, %c0_98] : memref<9x256xf32, #tpu.memory_space<vmem>>, vector<1x256xf32>
    %579 = vector.shape_cast %578 : vector<1x256xf32> to vector<256xf32>
    %580 = vector.shape_cast %579 : vector<256xf32> to vector<1x256xf32>
    %581 = vector.broadcast %580 : vector<1x256xf32> to vector<2x256xf32>
    %c1_i32_99 = arith.constant 1 : i32
    %582 = tpu.dynamic_rotate %423 by %c1_i32_99 dim 1 : vector<2x256xf32>, i32 -> vector<2x256xf32>
    %583 = arith.mulf %582, %581 : vector<2x256xf32>
    %c3_100 = arith.constant 3 : index
    %584 = memref.load %arg5[%c3_100] : memref<81xf32, #tpu.memory_space<smem>>
    %585 = vector.broadcast %584 : f32 to vector<2x256xf32>
    %586 = arith.mulf %583, %585 : vector<2x256xf32>
    %587 = arith.addf %569, %586 : vector<2x256xf32>
    %c30_101 = arith.constant 30 : index
    %588 = memref.load %arg5[%c30_101] : memref<81xf32, #tpu.memory_space<smem>>
    %589 = vector.broadcast %588 : f32 to vector<2x256xf32>
    %590 = arith.mulf %583, %589 : vector<2x256xf32>
    %591 = arith.addf %573, %590 : vector<2x256xf32>
    %c57_102 = arith.constant 57 : index
    %592 = memref.load %arg5[%c57_102] : memref<81xf32, #tpu.memory_space<smem>>
    %593 = vector.broadcast %592 : f32 to vector<2x256xf32>
    %594 = arith.mulf %583, %593 : vector<2x256xf32>
    %595 = arith.addf %577, %594 : vector<2x256xf32>
    %c1_i32_103 = arith.constant 1 : i32
    %596 = tpu.dynamic_rotate %425 by %c1_i32_103 dim 1 : vector<2x256xf32>, i32 -> vector<2x256xf32>
    %597 = arith.mulf %596, %581 : vector<2x256xf32>
    %c12_104 = arith.constant 12 : index
    %598 = memref.load %arg5[%c12_104] : memref<81xf32, #tpu.memory_space<smem>>
    %599 = vector.broadcast %598 : f32 to vector<2x256xf32>
    %600 = arith.mulf %597, %599 : vector<2x256xf32>
    %601 = arith.addf %587, %600 : vector<2x256xf32>
    %c39_105 = arith.constant 39 : index
    %602 = memref.load %arg5[%c39_105] : memref<81xf32, #tpu.memory_space<smem>>
    %603 = vector.broadcast %602 : f32 to vector<2x256xf32>
    %604 = arith.mulf %597, %603 : vector<2x256xf32>
    %605 = arith.addf %591, %604 : vector<2x256xf32>
    %c66_106 = arith.constant 66 : index
    %606 = memref.load %arg5[%c66_106] : memref<81xf32, #tpu.memory_space<smem>>
    %607 = vector.broadcast %606 : f32 to vector<2x256xf32>
    %608 = arith.mulf %597, %607 : vector<2x256xf32>
    %609 = arith.addf %595, %608 : vector<2x256xf32>
    %c1_i32_107 = arith.constant 1 : i32
    %610 = tpu.dynamic_rotate %427 by %c1_i32_107 dim 1 : vector<2x256xf32>, i32 -> vector<2x256xf32>
    %611 = arith.mulf %610, %581 : vector<2x256xf32>
    %c21_108 = arith.constant 21 : index
    %612 = memref.load %arg5[%c21_108] : memref<81xf32, #tpu.memory_space<smem>>
    %613 = vector.broadcast %612 : f32 to vector<2x256xf32>
    %614 = arith.mulf %611, %613 : vector<2x256xf32>
    %615 = arith.addf %601, %614 : vector<2x256xf32>
    %c48_109 = arith.constant 48 : index
    %616 = memref.load %arg5[%c48_109] : memref<81xf32, #tpu.memory_space<smem>>
    %617 = vector.broadcast %616 : f32 to vector<2x256xf32>
    %618 = arith.mulf %611, %617 : vector<2x256xf32>
    %619 = arith.addf %605, %618 : vector<2x256xf32>
    %c75_110 = arith.constant 75 : index
    %620 = memref.load %arg5[%c75_110] : memref<81xf32, #tpu.memory_space<smem>>
    %621 = vector.broadcast %620 : f32 to vector<2x256xf32>
    %622 = arith.mulf %611, %621 : vector<2x256xf32>
    %623 = arith.addf %609, %622 : vector<2x256xf32>
    %c4_111 = arith.constant 4 : index
    %624 = memref.load %arg5[%c4_111] : memref<81xf32, #tpu.memory_space<smem>>
    %625 = vector.broadcast %624 : f32 to vector<2x256xf32>
    %626 = arith.mulf %423, %625 : vector<2x256xf32>
    %627 = arith.addf %615, %626 : vector<2x256xf32>
    %c31_112 = arith.constant 31 : index
    %628 = memref.load %arg5[%c31_112] : memref<81xf32, #tpu.memory_space<smem>>
    %629 = vector.broadcast %628 : f32 to vector<2x256xf32>
    %630 = arith.mulf %423, %629 : vector<2x256xf32>
    %631 = arith.addf %619, %630 : vector<2x256xf32>
    %c58_113 = arith.constant 58 : index
    %632 = memref.load %arg5[%c58_113] : memref<81xf32, #tpu.memory_space<smem>>
    %633 = vector.broadcast %632 : f32 to vector<2x256xf32>
    %634 = arith.mulf %423, %633 : vector<2x256xf32>
    %635 = arith.addf %623, %634 : vector<2x256xf32>
    %c13_114 = arith.constant 13 : index
    %636 = memref.load %arg5[%c13_114] : memref<81xf32, #tpu.memory_space<smem>>
    %637 = vector.broadcast %636 : f32 to vector<2x256xf32>
    %638 = arith.mulf %425, %637 : vector<2x256xf32>
    %639 = arith.addf %627, %638 : vector<2x256xf32>
    %c40_115 = arith.constant 40 : index
    %640 = memref.load %arg5[%c40_115] : memref<81xf32, #tpu.memory_space<smem>>
    %641 = vector.broadcast %640 : f32 to vector<2x256xf32>
    %642 = arith.mulf %425, %641 : vector<2x256xf32>
    %643 = arith.addf %631, %642 : vector<2x256xf32>
    %c67_116 = arith.constant 67 : index
    %644 = memref.load %arg5[%c67_116] : memref<81xf32, #tpu.memory_space<smem>>
    %645 = vector.broadcast %644 : f32 to vector<2x256xf32>
    %646 = arith.mulf %425, %645 : vector<2x256xf32>
    %647 = arith.addf %635, %646 : vector<2x256xf32>
    %c22_117 = arith.constant 22 : index
    %648 = memref.load %arg5[%c22_117] : memref<81xf32, #tpu.memory_space<smem>>
    %649 = vector.broadcast %648 : f32 to vector<2x256xf32>
    %650 = arith.mulf %427, %649 : vector<2x256xf32>
    %651 = arith.addf %639, %650 : vector<2x256xf32>
    %c49_118 = arith.constant 49 : index
    %652 = memref.load %arg5[%c49_118] : memref<81xf32, #tpu.memory_space<smem>>
    %653 = vector.broadcast %652 : f32 to vector<2x256xf32>
    %654 = arith.mulf %427, %653 : vector<2x256xf32>
    %655 = arith.addf %643, %654 : vector<2x256xf32>
    %c76_119 = arith.constant 76 : index
    %656 = memref.load %arg5[%c76_119] : memref<81xf32, #tpu.memory_space<smem>>
    %657 = vector.broadcast %656 : f32 to vector<2x256xf32>
    %658 = arith.mulf %427, %657 : vector<2x256xf32>
    %659 = arith.addf %647, %658 : vector<2x256xf32>
    %c5_120 = arith.constant 5 : index
    %c0_121 = arith.constant 0 : index
    %660 = vector.load %arg2[%c5_120, %c0_121] : memref<9x256xf32, #tpu.memory_space<vmem>>, vector<1x256xf32>
    %661 = vector.shape_cast %660 : vector<1x256xf32> to vector<256xf32>
    %662 = vector.shape_cast %661 : vector<256xf32> to vector<1x256xf32>
    %663 = vector.broadcast %662 : vector<1x256xf32> to vector<2x256xf32>
    %c255_i32_122 = arith.constant 255 : i32
    %664 = tpu.dynamic_rotate %423 by %c255_i32_122 dim 1 : vector<2x256xf32>, i32 -> vector<2x256xf32>
    %665 = arith.mulf %664, %663 : vector<2x256xf32>
    %c5_123 = arith.constant 5 : index
    %666 = memref.load %arg5[%c5_123] : memref<81xf32, #tpu.memory_space<smem>>
    %667 = vector.broadcast %666 : f32 to vector<2x256xf32>
    %668 = arith.mulf %665, %667 : vector<2x256xf32>
    %669 = arith.addf %651, %668 : vector<2x256xf32>
    %c32_124 = arith.constant 32 : index
    %670 = memref.load %arg5[%c32_124] : memref<81xf32, #tpu.memory_space<smem>>
    %671 = vector.broadcast %670 : f32 to vector<2x256xf32>
    %672 = arith.mulf %665, %671 : vector<2x256xf32>
    %673 = arith.addf %655, %672 : vector<2x256xf32>
    %c59_125 = arith.constant 59 : index
    %674 = memref.load %arg5[%c59_125] : memref<81xf32, #tpu.memory_space<smem>>
    %675 = vector.broadcast %674 : f32 to vector<2x256xf32>
    %676 = arith.mulf %665, %675 : vector<2x256xf32>
    %677 = arith.addf %659, %676 : vector<2x256xf32>
    %c255_i32_126 = arith.constant 255 : i32
    %678 = tpu.dynamic_rotate %425 by %c255_i32_126 dim 1 : vector<2x256xf32>, i32 -> vector<2x256xf32>
    %679 = arith.mulf %678, %663 : vector<2x256xf32>
    %c14_127 = arith.constant 14 : index
    %680 = memref.load %arg5[%c14_127] : memref<81xf32, #tpu.memory_space<smem>>
    %681 = vector.broadcast %680 : f32 to vector<2x256xf32>
    %682 = arith.mulf %679, %681 : vector<2x256xf32>
    %683 = arith.addf %669, %682 : vector<2x256xf32>
    %c41_128 = arith.constant 41 : index
    %684 = memref.load %arg5[%c41_128] : memref<81xf32, #tpu.memory_space<smem>>
    %685 = vector.broadcast %684 : f32 to vector<2x256xf32>
    %686 = arith.mulf %679, %685 : vector<2x256xf32>
    %687 = arith.addf %673, %686 : vector<2x256xf32>
    %c68_129 = arith.constant 68 : index
    %688 = memref.load %arg5[%c68_129] : memref<81xf32, #tpu.memory_space<smem>>
    %689 = vector.broadcast %688 : f32 to vector<2x256xf32>
    %690 = arith.mulf %679, %689 : vector<2x256xf32>
    %691 = arith.addf %677, %690 : vector<2x256xf32>
    %c255_i32_130 = arith.constant 255 : i32
    %692 = tpu.dynamic_rotate %427 by %c255_i32_130 dim 1 : vector<2x256xf32>, i32 -> vector<2x256xf32>
    %693 = arith.mulf %692, %663 : vector<2x256xf32>
    %c23_131 = arith.constant 23 : index
    %694 = memref.load %arg5[%c23_131] : memref<81xf32, #tpu.memory_space<smem>>
    %695 = vector.broadcast %694 : f32 to vector<2x256xf32>
    %696 = arith.mulf %693, %695 : vector<2x256xf32>
    %697 = arith.addf %683, %696 : vector<2x256xf32>
    %c50_132 = arith.constant 50 : index
    %698 = memref.load %arg5[%c50_132] : memref<81xf32, #tpu.memory_space<smem>>
    %699 = vector.broadcast %698 : f32 to vector<2x256xf32>
    %700 = arith.mulf %693, %699 : vector<2x256xf32>
    %701 = arith.addf %687, %700 : vector<2x256xf32>
    %c77_133 = arith.constant 77 : index
    %702 = memref.load %arg5[%c77_133] : memref<81xf32, #tpu.memory_space<smem>>
    %703 = vector.broadcast %702 : f32 to vector<2x256xf32>
    %704 = arith.mulf %693, %703 : vector<2x256xf32>
    %705 = arith.addf %691, %704 : vector<2x256xf32>
    %c6_134 = arith.constant 6 : index
    %c0_135 = arith.constant 0 : index
    %706 = vector.load %arg2[%c6_134, %c0_135] : memref<9x256xf32, #tpu.memory_space<vmem>>, vector<1x256xf32>
    %707 = vector.shape_cast %706 : vector<1x256xf32> to vector<256xf32>
    %708 = vector.shape_cast %707 : vector<256xf32> to vector<1x256xf32>
    %709 = vector.broadcast %708 : vector<1x256xf32> to vector<2x256xf32>
    %c241_i32_136 = arith.constant 241 : i32
    %710 = tpu.dynamic_rotate %423 by %c241_i32_136 dim 1 : vector<2x256xf32>, i32 -> vector<2x256xf32>
    %711 = arith.mulf %710, %709 : vector<2x256xf32>
    %c6_137 = arith.constant 6 : index
    %712 = memref.load %arg5[%c6_137] : memref<81xf32, #tpu.memory_space<smem>>
    %713 = vector.broadcast %712 : f32 to vector<2x256xf32>
    %714 = arith.mulf %711, %713 : vector<2x256xf32>
    %715 = arith.addf %697, %714 : vector<2x256xf32>
    %c33_138 = arith.constant 33 : index
    %716 = memref.load %arg5[%c33_138] : memref<81xf32, #tpu.memory_space<smem>>
    %717 = vector.broadcast %716 : f32 to vector<2x256xf32>
    %718 = arith.mulf %711, %717 : vector<2x256xf32>
    %719 = arith.addf %701, %718 : vector<2x256xf32>
    %c60_139 = arith.constant 60 : index
    %720 = memref.load %arg5[%c60_139] : memref<81xf32, #tpu.memory_space<smem>>
    %721 = vector.broadcast %720 : f32 to vector<2x256xf32>
    %722 = arith.mulf %711, %721 : vector<2x256xf32>
    %723 = arith.addf %705, %722 : vector<2x256xf32>
    %c241_i32_140 = arith.constant 241 : i32
    %724 = tpu.dynamic_rotate %425 by %c241_i32_140 dim 1 : vector<2x256xf32>, i32 -> vector<2x256xf32>
    %725 = arith.mulf %724, %709 : vector<2x256xf32>
    %c15_141 = arith.constant 15 : index
    %726 = memref.load %arg5[%c15_141] : memref<81xf32, #tpu.memory_space<smem>>
    %727 = vector.broadcast %726 : f32 to vector<2x256xf32>
    %728 = arith.mulf %725, %727 : vector<2x256xf32>
    %729 = arith.addf %715, %728 : vector<2x256xf32>
    %c42_142 = arith.constant 42 : index
    %730 = memref.load %arg5[%c42_142] : memref<81xf32, #tpu.memory_space<smem>>
    %731 = vector.broadcast %730 : f32 to vector<2x256xf32>
    %732 = arith.mulf %725, %731 : vector<2x256xf32>
    %733 = arith.addf %719, %732 : vector<2x256xf32>
    %c69_143 = arith.constant 69 : index
    %734 = memref.load %arg5[%c69_143] : memref<81xf32, #tpu.memory_space<smem>>
    %735 = vector.broadcast %734 : f32 to vector<2x256xf32>
    %736 = arith.mulf %725, %735 : vector<2x256xf32>
    %737 = arith.addf %723, %736 : vector<2x256xf32>
    %c241_i32_144 = arith.constant 241 : i32
    %738 = tpu.dynamic_rotate %427 by %c241_i32_144 dim 1 : vector<2x256xf32>, i32 -> vector<2x256xf32>
    %739 = arith.mulf %738, %709 : vector<2x256xf32>
    %c24_145 = arith.constant 24 : index
    %740 = memref.load %arg5[%c24_145] : memref<81xf32, #tpu.memory_space<smem>>
    %741 = vector.broadcast %740 : f32 to vector<2x256xf32>
    %742 = arith.mulf %739, %741 : vector<2x256xf32>
    %743 = arith.addf %729, %742 : vector<2x256xf32>
    %c51_146 = arith.constant 51 : index
    %744 = memref.load %arg5[%c51_146] : memref<81xf32, #tpu.memory_space<smem>>
    %745 = vector.broadcast %744 : f32 to vector<2x256xf32>
    %746 = arith.mulf %739, %745 : vector<2x256xf32>
    %747 = arith.addf %733, %746 : vector<2x256xf32>
    %c78_147 = arith.constant 78 : index
    %748 = memref.load %arg5[%c78_147] : memref<81xf32, #tpu.memory_space<smem>>
    %749 = vector.broadcast %748 : f32 to vector<2x256xf32>
    %750 = arith.mulf %739, %749 : vector<2x256xf32>
    %751 = arith.addf %737, %750 : vector<2x256xf32>
    %c7_148 = arith.constant 7 : index
    %c0_149 = arith.constant 0 : index
    %752 = vector.load %arg2[%c7_148, %c0_149] : memref<9x256xf32, #tpu.memory_space<vmem>>, vector<1x256xf32>
    %753 = vector.shape_cast %752 : vector<1x256xf32> to vector<256xf32>
    %754 = vector.shape_cast %753 : vector<256xf32> to vector<1x256xf32>
    %755 = vector.broadcast %754 : vector<1x256xf32> to vector<2x256xf32>
    %c240_i32_150 = arith.constant 240 : i32
    %756 = tpu.dynamic_rotate %423 by %c240_i32_150 dim 1 : vector<2x256xf32>, i32 -> vector<2x256xf32>
    %757 = arith.mulf %756, %755 : vector<2x256xf32>
    %c7_151 = arith.constant 7 : index
    %758 = memref.load %arg5[%c7_151] : memref<81xf32, #tpu.memory_space<smem>>
    %759 = vector.broadcast %758 : f32 to vector<2x256xf32>
    %760 = arith.mulf %757, %759 : vector<2x256xf32>
    %761 = arith.addf %743, %760 : vector<2x256xf32>
    %c34_152 = arith.constant 34 : index
    %762 = memref.load %arg5[%c34_152] : memref<81xf32, #tpu.memory_space<smem>>
    %763 = vector.broadcast %762 : f32 to vector<2x256xf32>
    %764 = arith.mulf %757, %763 : vector<2x256xf32>
    %765 = arith.addf %747, %764 : vector<2x256xf32>
    %c61_153 = arith.constant 61 : index
    %766 = memref.load %arg5[%c61_153] : memref<81xf32, #tpu.memory_space<smem>>
    %767 = vector.broadcast %766 : f32 to vector<2x256xf32>
    %768 = arith.mulf %757, %767 : vector<2x256xf32>
    %769 = arith.addf %751, %768 : vector<2x256xf32>
    %c240_i32_154 = arith.constant 240 : i32
    %770 = tpu.dynamic_rotate %425 by %c240_i32_154 dim 1 : vector<2x256xf32>, i32 -> vector<2x256xf32>
    %771 = arith.mulf %770, %755 : vector<2x256xf32>
    %c16_155 = arith.constant 16 : index
    %772 = memref.load %arg5[%c16_155] : memref<81xf32, #tpu.memory_space<smem>>
    %773 = vector.broadcast %772 : f32 to vector<2x256xf32>
    %774 = arith.mulf %771, %773 : vector<2x256xf32>
    %775 = arith.addf %761, %774 : vector<2x256xf32>
    %c43_156 = arith.constant 43 : index
    %776 = memref.load %arg5[%c43_156] : memref<81xf32, #tpu.memory_space<smem>>
    %777 = vector.broadcast %776 : f32 to vector<2x256xf32>
    %778 = arith.mulf %771, %777 : vector<2x256xf32>
    %779 = arith.addf %765, %778 : vector<2x256xf32>
    %c70_157 = arith.constant 70 : index
    %780 = memref.load %arg5[%c70_157] : memref<81xf32, #tpu.memory_space<smem>>
    %781 = vector.broadcast %780 : f32 to vector<2x256xf32>
    %782 = arith.mulf %771, %781 : vector<2x256xf32>
    %783 = arith.addf %769, %782 : vector<2x256xf32>
    %c240_i32_158 = arith.constant 240 : i32
    %784 = tpu.dynamic_rotate %427 by %c240_i32_158 dim 1 : vector<2x256xf32>, i32 -> vector<2x256xf32>
    %785 = arith.mulf %784, %755 : vector<2x256xf32>
    %c25_159 = arith.constant 25 : index
    %786 = memref.load %arg5[%c25_159] : memref<81xf32, #tpu.memory_space<smem>>
    %787 = vector.broadcast %786 : f32 to vector<2x256xf32>
    %788 = arith.mulf %785, %787 : vector<2x256xf32>
    %789 = arith.addf %775, %788 : vector<2x256xf32>
    %c52_160 = arith.constant 52 : index
    %790 = memref.load %arg5[%c52_160] : memref<81xf32, #tpu.memory_space<smem>>
    %791 = vector.broadcast %790 : f32 to vector<2x256xf32>
    %792 = arith.mulf %785, %791 : vector<2x256xf32>
    %793 = arith.addf %779, %792 : vector<2x256xf32>
    %c79_161 = arith.constant 79 : index
    %794 = memref.load %arg5[%c79_161] : memref<81xf32, #tpu.memory_space<smem>>
    %795 = vector.broadcast %794 : f32 to vector<2x256xf32>
    %796 = arith.mulf %785, %795 : vector<2x256xf32>
    %797 = arith.addf %783, %796 : vector<2x256xf32>
    %c8_162 = arith.constant 8 : index
    %c0_163 = arith.constant 0 : index
    %798 = vector.load %arg2[%c8_162, %c0_163] : memref<9x256xf32, #tpu.memory_space<vmem>>, vector<1x256xf32>
    %799 = vector.shape_cast %798 : vector<1x256xf32> to vector<256xf32>
    %800 = vector.shape_cast %799 : vector<256xf32> to vector<1x256xf32>
    %801 = vector.broadcast %800 : vector<1x256xf32> to vector<2x256xf32>
    %c239_i32_164 = arith.constant 239 : i32
    %802 = tpu.dynamic_rotate %423 by %c239_i32_164 dim 1 : vector<2x256xf32>, i32 -> vector<2x256xf32>
    %803 = arith.mulf %802, %801 : vector<2x256xf32>
    %c8_165 = arith.constant 8 : index
    %804 = memref.load %arg5[%c8_165] : memref<81xf32, #tpu.memory_space<smem>>
    %805 = vector.broadcast %804 : f32 to vector<2x256xf32>
    %806 = arith.mulf %803, %805 : vector<2x256xf32>
    %807 = arith.addf %789, %806 : vector<2x256xf32>
    %c35_166 = arith.constant 35 : index
    %808 = memref.load %arg5[%c35_166] : memref<81xf32, #tpu.memory_space<smem>>
    %809 = vector.broadcast %808 : f32 to vector<2x256xf32>
    %810 = arith.mulf %803, %809 : vector<2x256xf32>
    %811 = arith.addf %793, %810 : vector<2x256xf32>
    %c62_167 = arith.constant 62 : index
    %812 = memref.load %arg5[%c62_167] : memref<81xf32, #tpu.memory_space<smem>>
    %813 = vector.broadcast %812 : f32 to vector<2x256xf32>
    %814 = arith.mulf %803, %813 : vector<2x256xf32>
    %815 = arith.addf %797, %814 : vector<2x256xf32>
    %c239_i32_168 = arith.constant 239 : i32
    %816 = tpu.dynamic_rotate %425 by %c239_i32_168 dim 1 : vector<2x256xf32>, i32 -> vector<2x256xf32>
    %817 = arith.mulf %816, %801 : vector<2x256xf32>
    %c17_169 = arith.constant 17 : index
    %818 = memref.load %arg5[%c17_169] : memref<81xf32, #tpu.memory_space<smem>>
    %819 = vector.broadcast %818 : f32 to vector<2x256xf32>
    %820 = arith.mulf %817, %819 : vector<2x256xf32>
    %821 = arith.addf %807, %820 : vector<2x256xf32>
    %c44_170 = arith.constant 44 : index
    %822 = memref.load %arg5[%c44_170] : memref<81xf32, #tpu.memory_space<smem>>
    %823 = vector.broadcast %822 : f32 to vector<2x256xf32>
    %824 = arith.mulf %817, %823 : vector<2x256xf32>
    %825 = arith.addf %811, %824 : vector<2x256xf32>
    %c71_171 = arith.constant 71 : index
    %826 = memref.load %arg5[%c71_171] : memref<81xf32, #tpu.memory_space<smem>>
    %827 = vector.broadcast %826 : f32 to vector<2x256xf32>
    %828 = arith.mulf %817, %827 : vector<2x256xf32>
    %829 = arith.addf %815, %828 : vector<2x256xf32>
    %c239_i32_172 = arith.constant 239 : i32
    %830 = tpu.dynamic_rotate %427 by %c239_i32_172 dim 1 : vector<2x256xf32>, i32 -> vector<2x256xf32>
    %831 = arith.mulf %830, %801 : vector<2x256xf32>
    %c26_173 = arith.constant 26 : index
    %832 = memref.load %arg5[%c26_173] : memref<81xf32, #tpu.memory_space<smem>>
    %833 = vector.broadcast %832 : f32 to vector<2x256xf32>
    %834 = arith.mulf %831, %833 : vector<2x256xf32>
    %835 = arith.addf %821, %834 : vector<2x256xf32>
    %c53_174 = arith.constant 53 : index
    %836 = memref.load %arg5[%c53_174] : memref<81xf32, #tpu.memory_space<smem>>
    %837 = vector.broadcast %836 : f32 to vector<2x256xf32>
    %838 = arith.mulf %831, %837 : vector<2x256xf32>
    %839 = arith.addf %825, %838 : vector<2x256xf32>
    %c80_175 = arith.constant 80 : index
    %840 = memref.load %arg5[%c80_175] : memref<81xf32, #tpu.memory_space<smem>>
    %841 = vector.broadcast %840 : f32 to vector<2x256xf32>
    %842 = arith.mulf %831, %841 : vector<2x256xf32>
    %843 = arith.addf %829, %842 : vector<2x256xf32>
    %cst_176 = arith.constant 0.000000e+00 : f32
    %844 = vector.broadcast %cst_176 : f32 to vector<2x256xf32>
    %845 = arith.maximumf %835, %844 : vector<2x256xf32>
    %cst_177 = arith.constant 0.000000e+00 : f32
    %846 = vector.broadcast %cst_177 : f32 to vector<2x256xf32>
    %847 = arith.maximumf %839, %846 : vector<2x256xf32>
    %cst_178 = arith.constant 0.000000e+00 : f32
    %848 = vector.broadcast %cst_178 : f32 to vector<2x256xf32>
    %849 = arith.maximumf %843, %848 : vector<2x256xf32>
    %850 = arith.addf %845, %1 : vector<2x256xf32>
    %c0_179 = arith.constant 0 : index
    %c0_180 = arith.constant 0 : index
    %c0_181 = arith.constant 0 : index
    %851 = vector.load %arg7[%c0_179, %c0_180, %c0_181] : memref<3x2x256xf32, #tpu.memory_space<vmem>>, vector<1x2x256xf32>
    %852 = vector.shape_cast %851 : vector<1x2x256xf32> to vector<2x256xf32>
    %853 = vector.shape_cast %850 : vector<2x256xf32> to vector<1x2x256xf32>
    tpu.vector_store %arg7[%c0_179, %c0_180, %c0_181], %853 {strides = array<i32>} : memref<3x2x256xf32, #tpu.memory_space<vmem>>, vector<1x2x256xf32>,
    %854 = arith.addf %847, %3 : vector<2x256xf32>
    %c1_182 = arith.constant 1 : index
    %c0_183 = arith.constant 0 : index
    %c0_184 = arith.constant 0 : index
    %855 = vector.load %arg7[%c1_182, %c0_183, %c0_184] : memref<3x2x256xf32, #tpu.memory_space<vmem>>, vector<1x2x256xf32>
    %856 = vector.shape_cast %855 : vector<1x2x256xf32> to vector<2x256xf32>
    %857 = vector.shape_cast %854 : vector<2x256xf32> to vector<1x2x256xf32>
    tpu.vector_store %arg7[%c1_182, %c0_183, %c0_184], %857 {strides = array<i32>} : memref<3x2x256xf32, #tpu.memory_space<vmem>>, vector<1x2x256xf32>,
    %858 = arith.addf %849, %5 : vector<2x256xf32>
    %c2_185 = arith.constant 2 : index
    %c0_186 = arith.constant 0 : index
    %c0_187 = arith.constant 0 : index
    %859 = vector.load %arg7[%c2_185, %c0_186, %c0_187] : memref<3x2x256xf32, #tpu.memory_space<vmem>>, vector<1x2x256xf32>
    %860 = vector.shape_cast %859 : vector<1x2x256xf32> to vector<2x256xf32>
    %861 = vector.shape_cast %858 : vector<2x256xf32> to vector<1x2x256xf32>
    tpu.vector_store %arg7[%c2_185, %c0_186, %c0_187], %861 {strides = array<i32>} : memref<3x2x256xf32, #tpu.memory_space<vmem>>, vector<1x2x256xf32>,
    return
  }
  func.func @transform_0(%arg0: i32) -> (i32, i32, i32) {
    %c0_i32 = arith.constant 0 : i32
    %c0_i32_0 = arith.constant 0 : i32
    %c0_i32_1 = arith.constant 0 : i32
    return %c0_i32, %arg0, %c0_i32_0 : i32, i32, i32
  }
  func.func @transform_1(%arg0: i32) -> (i32, i32) {
    %c0_i32 = arith.constant 0 : i32
    %c0_i32_0 = arith.constant 0 : i32
    %c0_i32_1 = arith.constant 0 : i32
    return %c0_i32, %c0_i32_0 : i32, i32
  }
  func.func @transform_2(%arg0: i32) -> i32 {
    %c0_i32 = arith.constant 0 : i32
    %c0_i32_0 = arith.constant 0 : i32
    return %c0_i32 : i32
  }
  func.func @transform_3(%arg0: i32) -> i32 {
    %c0_i32 = arith.constant 0 : i32
    %c0_i32_0 = arith.constant 0 : i32
    return %c0_i32 : i32
  }
  func.func @transform_4(%arg0: i32) -> i32 {
    %c0_i32 = arith.constant 0 : i32
    %c0_i32_0 = arith.constant 0 : i32
    return %c0_i32 : i32
  }
  func.func @transform_5(%arg0: i32) -> i32 {
    %c0_i32 = arith.constant 0 : i32
    %c0_i32_0 = arith.constant 0 : i32
    return %c0_i32 : i32
  }
  func.func @transform_6(%arg0: i32) -> (i32, i32, i32) {
    %c0_i32 = arith.constant 0 : i32
    %c0_i32_0 = arith.constant 0 : i32
    %c0_i32_1 = arith.constant 0 : i32
    return %c0_i32, %arg0, %c0_i32_0 : i32, i32, i32
  }
}

</mosaic_0001>

<llo_original>
// kernel: simple_residual_block.1
$region0: #{simple_residual_block.1}
  #allocation0 [shape = 'u32[]', space=smem, size = 0x4, offset = 0x4, fixed_abs, tag = 'smem constant byte address 0x4 - core index']
  #allocation1 [shape = 'u32[144,128]{1,0:T(1,128)}', space=vmem, size = 0x12000, scoped, tag = 'internal scratch']
  %s0 = inlined_call_operand.vmem [shape: f32[3,2,256], index: 0, kind: input, shape index: {}]
  %s1 = inlined_call_operand.vmem [shape: f32[9,256], index: 1, kind: input, shape index: {}]
  %s2 = inlined_call_operand.vmem [shape: f32[81], index: 2, kind: input, shape index: {}]
  %s3 = inlined_call_operand.vmem [shape: f32[3], index: 3, kind: input, shape index: {}]
  %s4 = inlined_call_operand.vmem [shape: f32[81], index: 4, kind: input, shape index: {}]
  %s5 = inlined_call_operand.vmem [shape: f32[3], index: 5, kind: input, shape index: {}]
  %s6 = inlined_call_operand.vmem [shape: f32[3,2,256], index: 6, kind: output, shape index: {}]
  %s7 = sld [smem:[#allocation0]]
  $region50: #{simple_residual_block.1} parent=0
    _
  %s9 = ssub.s32 1, %s7
  %s10 = scalar_select 0, %s9, %s7
  $region1: #{simple_residual_block.1} parent=0
    #allocation2 [shape = 'u8[512]{0}', space=smem, size = 0x200, scoped, tag = 'input window, operand 2, single buffered']
    #allocation3 [shape = 's32[1]{0}', space=sflag, size = 0x4, scoped, tag = 'scoped memory for simple_residual_block.1']
    #allocation4 [shape = 'u8[512]{0}', space=smem, size = 0x200, scoped, tag = 'input window, operand 3, single buffered']
    #allocation5 [shape = 's32[1]{0}', space=sflag, size = 0x4, scoped, tag = 'scoped memory for simple_residual_block.1']
    #allocation6 [shape = 'u8[512]{0}', space=smem, size = 0x200, scoped, tag = 'input window, operand 4, single buffered']
    #allocation7 [shape = 'u8[512]{0}', space=smem, size = 0x200, scoped, tag = 'input window, operand 5, single buffered']
    #allocation8 [shape = 's32[1]{0}', space=sflag, size = 0x4, scoped, tag = 'scoped memory for simple_residual_block.1']
    %11 = vsyncpa [#allocation3], 0
    %12 = vsyncpa [#allocation5], 0
    %13 = vsyncpa [#allocation8], 0
    // Predicated region
    $region2: #{simple_residual_block.1} parent=1 // pred_check
      _
    $region3: #{simple_residual_block.1} parent=1 // pred_check_branch
      %15 = sbr.rel (0) target = $region5
    $region4: #{simple_residual_block.1} parent=1 // pred_region
      _
    $region5: #{simple_residual_block.1} parent=1 // pred_fallthru
      _
    // Predicated region
    $region6: #{simple_residual_block.1} parent=1 // pred_check
      _
    $region7: #{simple_residual_block.1} parent=1 // pred_check_branch
      %17 = sbr.rel (0) target = $region9
    $region8: #{simple_residual_block.1} parent=1 // pred_region
      _
    $region9: #{simple_residual_block.1} parent=1 // pred_fallthru
      _
    // Predicated region
    $region10: #{simple_residual_block.1} parent=1 // pred_check
      _
    $region11: #{simple_residual_block.1} parent=1 // pred_check_branch
      %19 = sbr.rel (0) target = $region13
    $region12: #{simple_residual_block.1} parent=1 // pred_region
      %s21 = ssub.s32 16, 16
      %22 = vsyncadd [#allocation3], %s21
      %s24 = sshll.u32 %s2, 4
      %s25 = int_to_ptr.vmem [resolvable:$true] %s24
      %27 = dma.vmem_to_smem %s25, 16, [#allocation2], [#allocation3]
    $region13: #{simple_residual_block.1} parent=1 // pred_fallthru
      _
    // Predicated region
    $region14: #{simple_residual_block.1} parent=1 // pred_check
      _
    $region15: #{simple_residual_block.1} parent=1 // pred_check_branch
      %29 = sbr.rel (0) target = $region17
    $region16: #{simple_residual_block.1} parent=1 // pred_region
      %s31 = ssub.s32 16, 16
      %32 = vsyncadd [#allocation5], %s31
      %s34 = sshll.u32 %s3, 4
      %s35 = int_to_ptr.vmem [resolvable:$true] %s34
      %37 = dma.vmem_to_smem %s35, 16, [#allocation4], [#allocation5]
    $region17: #{simple_residual_block.1} parent=1 // pred_fallthru
      _
    // Predicated region
    $region18: #{simple_residual_block.1} parent=1 // pred_check
      _
    $region19: #{simple_residual_block.1} parent=1 // pred_check_branch
      %39 = sbr.rel (0) target = $region21
    $region20: #{simple_residual_block.1} parent=1 // pred_region
      %s41 = ssub.s32 16, 16
      %42 = vsyncadd [#allocation5], %s41
      %s44 = sshll.u32 %s4, 4
      %s45 = int_to_ptr.vmem [resolvable:$true] %s44
      %47 = dma.vmem_to_smem %s45, 16, [#allocation6], [#allocation5]
    $region21: #{simple_residual_block.1} parent=1 // pred_fallthru
      _
    // Predicated region
    $region22: #{simple_residual_block.1} parent=1 // pred_check
      _
    $region23: #{simple_residual_block.1} parent=1 // pred_check_branch
      %49 = sbr.rel (0) target = $region25
    $region24: #{simple_residual_block.1} parent=1 // pred_region
      %s51 = ssub.s32 16, 16
      %52 = vsyncadd [#allocation8], %s51
      %s54 = sshll.u32 %s5, 4
      %s55 = int_to_ptr.vmem [resolvable:$true] %s54
      %57 = dma.vmem_to_smem %s55, 16, [#allocation7], [#allocation8]
    $region25: #{simple_residual_block.1} parent=1 // pred_fallthru
      _
    // Predicated region
    $region26: #{simple_residual_block.1} parent=1 // pred_check
      _
    $region27: #{simple_residual_block.1} parent=1 // pred_check_branch
      %59 = sbr.rel (0) target = $region29
    $region28: #{simple_residual_block.1} parent=1 // pred_region
      %60 = dma.done [#allocation3], 16
    $region29: #{simple_residual_block.1} parent=1 // pred_fallthru
      _
    // Predicated region
    $region30: #{simple_residual_block.1} parent=1 // pred_check
      _
    $region31: #{simple_residual_block.1} parent=1 // pred_check_branch
      %62 = sbr.rel (0) target = $region33
    $region32: #{simple_residual_block.1} parent=1 // pred_region
      %63 = dma.done [#allocation5], 16
    $region33: #{simple_residual_block.1} parent=1 // pred_fallthru
      _
    // Predicated region
    $region34: #{simple_residual_block.1} parent=1 // pred_check
      _
    $region35: #{simple_residual_block.1} parent=1 // pred_check_branch
      %65 = sbr.rel (0) target = $region37
    $region36: #{simple_residual_block.1} parent=1 // pred_region
      %66 = dma.done [#allocation5], 16
    $region37: #{simple_residual_block.1} parent=1 // pred_fallthru
      _
    // Predicated region
    $region38: #{simple_residual_block.1} parent=1 // pred_check
      _
    $region39: #{simple_residual_block.1} parent=1 // pred_check_branch
      %68 = sbr.rel (0) target = $region41
    $region40: #{simple_residual_block.1} parent=1 // pred_region
      %69 = dma.done [#allocation8], 16
    $region41: #{simple_residual_block.1} parent=1 // pred_fallthru
      _
    %70 = sfence
    %v71 = vld [vmem:[%s0] sm:$0xf]
    %s72 = scalar_lea.vmem %s0, 4
    %v73 = vld [vmem:[%s72] sm:$0xf]
    %s74 = scalar_lea.vmem %s0, 8
    %v75 = vld [vmem:[%s74] sm:$0xf]
    %s76 = sld [smem:[#allocation4]]
    %v77 = vstv %s76
    %v78 = vadd.f32 %v77, 0.0
    %s79 = sld [smem:[#allocation4 + $0x1]]
    %v80 = vstv %s79
    %v81 = vadd.f32 %v80, 0.0
    %s82 = sld [smem:[#allocation4 + $0x2]]
    %v83 = vstv %s82
    %v84 = vadd.f32 %v83, 0.0
    %v85 = vld [vmem:[%s1] ss:$8 sm:$0x3]
    %v87 = vlaneseq
    %v88 = vshrl.u32 %v87, 7
    %v89 = vsub.s32 0, %v88
    %v90 = vrot.slane %v85, %v89
    %v91 = vlaneseq
    %v92 = vshrl.u32 %v91, 7
    %v93 = vsub.s32 1, %v92
    %v94 = vrot.slane %v85, %v93
    %v99 = vunpack.c.l.s4 1983009808
    %v100 = vunpack.c.0.s8 %v99
    %v101 = vlaneseq
    %v102 = vshrl.u32 %v101, 7
    %v103 = vsub.s32 %v100, %v102
    %v104 = vrot.slane %v71, %v103
    %v105 = vcombine.high %v104, %v104
    %108 = vrot.lane.b32.xlu0 %v104, 17
    %v109 = vpop.permute.xlu0 %108
    %110 = vrot.lane.b32.xlu0 %v105, 17
    %v111 = vpop.permute.xlu0 %110
    %v112 = vlaneseq
    %v113 = vand.u32 %v112, 127
    %vm114 = vcmp.lt.s32.totalorder %v113, 17
    %v115 = vsel %vm114, %v109, %v111
    %v116 = vsel %vm114, %v111, %v109
    %v117 = vmul.f32 %v116, %v90
    %v118 = vmul.f32 %v115, %v94
    %s119 = sld [smem:[#allocation2]]
    %v120 = vstv %s119
    %v121 = vmul.f32 %v117, %v120
    %v122 = vmul.f32 %v118, %v120
    %v123 = vadd.f32 %v78, %v121
    %v124 = vadd.f32 %v78, %v122
    %s125 = sld [smem:[#allocation2 + $0x1b]]
    %v126 = vstv %s125
    %v127 = vmul.f32 %v117, %v126
    %v128 = vmul.f32 %v118, %v126
    %v129 = vadd.f32 %v81, %v127
    %v130 = vadd.f32 %v81, %v128
    %s131 = sld [smem:[#allocation2 + $0x36]]
    %v132 = vstv %s131
    %v133 = vmul.f32 %v117, %v132
    %v134 = vmul.f32 %v118, %v132
    %v135 = vadd.f32 %v84, %v133
    %v136 = vadd.f32 %v84, %v134
    %v139 = vunpack.c.l.s4 1983009808
    %v140 = vunpack.c.0.s8 %v139
    %v141 = vlaneseq
    %v142 = vshrl.u32 %v141, 7
    %v143 = vsub.s32 %v140, %v142
    %v144 = vrot.slane %v73, %v143
    %v145 = vcombine.high %v144, %v144
    %148 = vrot.lane.b32.xlu0 %v144, 17
    %v149 = vpop.permute.xlu0 %148
    %150 = vrot.lane.b32.xlu0 %v145, 17
    %v151 = vpop.permute.xlu0 %150
    %v152 = vsel %vm114, %v149, %v151
    %v153 = vsel %vm114, %v151, %v149
    %v154 = vmul.f32 %v153, %v90
    %v155 = vmul.f32 %v152, %v94
    %s156 = sld [smem:[#allocation2 + $0x9]]
    %v157 = vstv %s156
    %v158 = vmul.f32 %v154, %v157
    %v159 = vmul.f32 %v155, %v157
    %v160 = vadd.f32 %v123, %v158
    %v161 = vadd.f32 %v124, %v159
    %s162 = sld [smem:[#allocation2 + $0x24]]
    %v163 = vstv %s162
    %v164 = vmul.f32 %v154, %v163
    %v165 = vmul.f32 %v155, %v163
    %v166 = vadd.f32 %v129, %v164
    %v167 = vadd.f32 %v130, %v165
    %s168 = sld [smem:[#allocation2 + $0x3f]]
    %v169 = vstv %s168
    %v170 = vmul.f32 %v154, %v169
    %v171 = vmul.f32 %v155, %v169
    %v172 = vadd.f32 %v135, %v170
    %v173 = vadd.f32 %v136, %v171
    %v176 = vunpack.c.l.s4 1983009808
    %v177 = vunpack.c.0.s8 %v176
    %v178 = vlaneseq
    %v179 = vshrl.u32 %v178, 7
    %v180 = vsub.s32 %v177, %v179
    %v181 = vrot.slane %v75, %v180
    %v182 = vcombine.high %v181, %v181
    %185 = vrot.lane.b32.xlu0 %v181, 17
    %v186 = vpop.permute.xlu0 %185
    %187 = vrot.lane.b32.xlu0 %v182, 17
    %v188 = vpop.permute.xlu0 %187
    %v189 = vsel %vm114, %v186, %v188
    %v190 = vsel %vm114, %v188, %v186
    %v191 = vmul.f32 %v190, %v90
    %v192 = vmul.f32 %v189, %v94
    %s193 = sld [smem:[#allocation2 + $0x12]]
    %v194 = vstv %s193
    %v195 = vmul.f32 %v191, %v194
    %v196 = vmul.f32 %v192, %v194
    %v197 = vadd.f32 %v160, %v195
    %v198 = vadd.f32 %v161, %v196
    %s199 = sld [smem:[#allocation2 + $0x2d]]
    %v200 = vstv %s199
    %v201 = vmul.f32 %v191, %v200
    %v202 = vmul.f32 %v192, %v200
    %v203 = vadd.f32 %v166, %v201
    %v204 = vadd.f32 %v167, %v202
    %s205 = sld [smem:[#allocation2 + $0x48]]
    %v206 = vstv %s205
    %v207 = vmul.f32 %v191, %v206
    %v208 = vmul.f32 %v192, %v206
    %v209 = vadd.f32 %v172, %v207
    %v210 = vadd.f32 %v173, %v208
    %s211 = scalar_lea.vmem %s1, 1
    %v212 = vld [vmem:[%s211] ss:$8 sm:$0x3]
    %v214 = vlaneseq
    %v215 = vshrl.u32 %v214, 7
    %v216 = vsub.s32 0, %v215
    %v217 = vrot.slane %v212, %v216
    %v218 = vlaneseq
    %v219 = vshrl.u32 %v218, 7
    %v220 = vsub.s32 1, %v219
    %v221 = vrot.slane %v212, %v220
    %224 = vrot.lane.b32.xlu0 %v104, 16
    %v225 = vpop.permute.xlu0 %224
    %226 = vrot.lane.b32.xlu0 %v105, 16
    %v227 = vpop.permute.xlu0 %226
    %vm228 = vcmp.lt.s32.totalorder %v113, 16
    %v229 = vsel %vm228, %v225, %v227
    %v230 = vsel %vm228, %v227, %v225
    %v231 = vmul.f32 %v230, %v217
    %v232 = vmul.f32 %v229, %v221
    %s233 = sld [smem:[#allocation2 + $0x1]]
    %v234 = vstv %s233
    %v235 = vmul.f32 %v231, %v234
    %v236 = vmul.f32 %v232, %v234
    %v237 = vadd.f32 %v197, %v235
    %v238 = vadd.f32 %v198, %v236
    %s239 = sld [smem:[#allocation2 + $0x1c]]
    %v240 = vstv %s239
    %v241 = vmul.f32 %v231, %v240
    %v242 = vmul.f32 %v232, %v240
    %v243 = vadd.f32 %v203, %v241
    %v244 = vadd.f32 %v204, %v242
    %s245 = sld [smem:[#allocation2 + $0x37]]
    %v246 = vstv %s245
    %v247 = vmul.f32 %v231, %v246
    %v248 = vmul.f32 %v232, %v246
    %v249 = vadd.f32 %v209, %v247
    %v250 = vadd.f32 %v210, %v248
    %251 = vrot.lane.b32.xlu0 %v144, 16
    %v252 = vpop.permute.xlu0 %251
    %253 = vrot.lane.b32.xlu0 %v145, 16
    %v254 = vpop.permute.xlu0 %253
    %v255 = vsel %vm228, %v252, %v254
    %v256 = vsel %vm228, %v254, %v252
    %v257 = vmul.f32 %v256, %v217
    %v258 = vmul.f32 %v255, %v221
    %s259 = sld [smem:[#allocation2 + $0xa]]
    %v260 = vstv %s259
    %v261 = vmul.f32 %v257, %v260
    %v262 = vmul.f32 %v258, %v260
    %v263 = vadd.f32 %v237, %v261
    %v264 = vadd.f32 %v238, %v262
    %s265 = sld [smem:[#allocation2 + $0x25]]
    %v266 = vstv %s265
    %v267 = vmul.f32 %v257, %v266
    %v268 = vmul.f32 %v258, %v266
    %v269 = vadd.f32 %v243, %v267
    %v270 = vadd.f32 %v244, %v268
    %s271 = sld [smem:[#allocation2 + $0x40]]
    %v272 = vstv %s271
    %v273 = vmul.f32 %v257, %v272
    %v274 = vmul.f32 %v258, %v272
    %v275 = vadd.f32 %v249, %v273
    %v276 = vadd.f32 %v250, %v274
    %277 = vrot.lane.b32.xlu0 %v181, 16
    %v278 = vpop.permute.xlu0 %277
    %279 = vrot.lane.b32.xlu0 %v182, 16
    %v280 = vpop.permute.xlu0 %279
    %v281 = vsel %vm228, %v278, %v280
    %v282 = vsel %vm228, %v280, %v278
    %v283 = vmul.f32 %v282, %v217
    %v284 = vmul.f32 %v281, %v221
    %s285 = sld [smem:[#allocation2 + $0x13]]
    %v286 = vstv %s285
    %v287 = vmul.f32 %v283, %v286
    %v288 = vmul.f32 %v284, %v286
    %v289 = vadd.f32 %v263, %v287
    %v290 = vadd.f32 %v264, %v288
    %s291 = sld [smem:[#allocation2 + $0x2e]]
    %v292 = vstv %s291
    %v293 = vmul.f32 %v283, %v292
    %v294 = vmul.f32 %v284, %v292
    %v295 = vadd.f32 %v269, %v293
    %v296 = vadd.f32 %v270, %v294
    %s297 = sld [smem:[#allocation2 + $0x49]]
    %v298 = vstv %s297
    %v299 = vmul.f32 %v283, %v298
    %v300 = vmul.f32 %v284, %v298
    %v301 = vadd.f32 %v275, %v299
    %v302 = vadd.f32 %v276, %v300
    %s303 = scalar_lea.vmem %s1, 2
    %v304 = vld [vmem:[%s303] ss:$8 sm:$0x3]
    %v306 = vlaneseq
    %v307 = vshrl.u32 %v306, 7
    %v308 = vsub.s32 0, %v307
    %v309 = vrot.slane %v304, %v308
    %v310 = vlaneseq
    %v311 = vshrl.u32 %v310, 7
    %v312 = vsub.s32 1, %v311
    %v313 = vrot.slane %v304, %v312
    %316 = vrot.lane.b32.xlu0 %v104, 15
    %v317 = vpop.permute.xlu0 %316
    %318 = vrot.lane.b32.xlu0 %v105, 15
    %v319 = vpop.permute.xlu0 %318
    %vm320 = vcmp.lt.s32.totalorder %v113, 15
    %v321 = vsel %vm320, %v317, %v319
    %v322 = vsel %vm320, %v319, %v317
    %v323 = vmul.f32 %v322, %v309
    %v324 = vmul.f32 %v321, %v313
    %s325 = sld [smem:[#allocation2 + $0x2]]
    %v326 = vstv %s325
    %v327 = vmul.f32 %v323, %v326
    %v328 = vmul.f32 %v324, %v326
    %v329 = vadd.f32 %v289, %v327
    %v330 = vadd.f32 %v290, %v328
    %s331 = sld [smem:[#allocation2 + $0x1d]]
    %v332 = vstv %s331
    %v333 = vmul.f32 %v323, %v332
    %v334 = vmul.f32 %v324, %v332
    %v335 = vadd.f32 %v295, %v333
    %v336 = vadd.f32 %v296, %v334
    %s337 = sld [smem:[#allocation2 + $0x38]]
    %v338 = vstv %s337
    %v339 = vmul.f32 %v323, %v338
    %v340 = vmul.f32 %v324, %v338
    %v341 = vadd.f32 %v301, %v339
    %v342 = vadd.f32 %v302, %v340
    %343 = vrot.lane.b32.xlu0 %v144, 15
    %v344 = vpop.permute.xlu0 %343
    %345 = vrot.lane.b32.xlu0 %v145, 15
    %v346 = vpop.permute.xlu0 %345
    %v347 = vsel %vm320, %v344, %v346
    %v348 = vsel %vm320, %v346, %v344
    %v349 = vmul.f32 %v348, %v309
    %v350 = vmul.f32 %v347, %v313
    %s351 = sld [smem:[#allocation2 + $0xb]]
    %v352 = vstv %s351
    %v353 = vmul.f32 %v349, %v352
    %v354 = vmul.f32 %v350, %v352
    %v355 = vadd.f32 %v329, %v353
    %v356 = vadd.f32 %v330, %v354
    %s357 = sld [smem:[#allocation2 + $0x26]]
    %v358 = vstv %s357
    %v359 = vmul.f32 %v349, %v358
    %v360 = vmul.f32 %v350, %v358
    %v361 = vadd.f32 %v335, %v359
    %v362 = vadd.f32 %v336, %v360
    %s363 = sld [smem:[#allocation2 + $0x41]]
    %v364 = vstv %s363
    %v365 = vmul.f32 %v349, %v364
    %v366 = vmul.f32 %v350, %v364
    %v367 = vadd.f32 %v341, %v365
    %v368 = vadd.f32 %v342, %v366
    %369 = vrot.lane.b32.xlu0 %v181, 15
    %v370 = vpop.permute.xlu0 %369
    %371 = vrot.lane.b32.xlu0 %v182, 15
    %v372 = vpop.permute.xlu0 %371
    %v373 = vsel %vm320, %v370, %v372
    %v374 = vsel %vm320, %v372, %v370
    %v375 = vmul.f32 %v374, %v309
    %v376 = vmul.f32 %v373, %v313
    %s377 = sld [smem:[#allocation2 + $0x14]]
    %v378 = vstv %s377
    %v379 = vmul.f32 %v375, %v378
    %v380 = vmul.f32 %v376, %v378
    %v381 = vadd.f32 %v355, %v379
    %v382 = vadd.f32 %v356, %v380
    %s383 = sld [smem:[#allocation2 + $0x2f]]
    %v384 = vstv %s383
    %v385 = vmul.f32 %v375, %v384
    %v386 = vmul.f32 %v376, %v384
    %v387 = vadd.f32 %v361, %v385
    %v388 = vadd.f32 %v362, %v386
    %s389 = sld [smem:[#allocation2 + $0x4a]]
    %v390 = vstv %s389
    %v391 = vmul.f32 %v375, %v390
    %v392 = vmul.f32 %v376, %v390
    %v393 = vadd.f32 %v367, %v391
    %v394 = vadd.f32 %v368, %v392
    %s395 = scalar_lea.vmem %s1, 3
    %v396 = vld [vmem:[%s395] ss:$8 sm:$0x3]
    %v398 = vlaneseq
    %v399 = vshrl.u32 %v398, 7
    %v400 = vsub.s32 0, %v399
    %v401 = vrot.slane %v396, %v400
    %v402 = vlaneseq
    %v403 = vshrl.u32 %v402, 7
    %v404 = vsub.s32 1, %v403
    %v405 = vrot.slane %v396, %v404
    %408 = vrot.lane.b32.xlu0 %v104, 1
    %v409 = vpop.permute.xlu0 %408
    %410 = vrot.lane.b32.xlu0 %v105, 1
    %v411 = vpop.permute.xlu0 %410
    %vm412 = vcmp.lt.s32.totalorder %v113, 1
    %v413 = vsel %vm412, %v409, %v411
    %v414 = vsel %vm412, %v411, %v409
    %v415 = vmul.f32 %v414, %v401
    %v416 = vmul.f32 %v413, %v405
    %s417 = sld [smem:[#allocation2 + $0x3]]
    %v418 = vstv %s417
    %v419 = vmul.f32 %v415, %v418
    %v420 = vmul.f32 %v416, %v418
    %v421 = vadd.f32 %v381, %v419
    %v422 = vadd.f32 %v382, %v420
    %s423 = sld [smem:[#allocation2 + $0x1e]]
    %v424 = vstv %s423
    %v425 = vmul.f32 %v415, %v424
    %v426 = vmul.f32 %v416, %v424
    %v427 = vadd.f32 %v387, %v425
    %v428 = vadd.f32 %v388, %v426
    %s429 = sld [smem:[#allocation2 + $0x39]]
    %v430 = vstv %s429
    %v431 = vmul.f32 %v415, %v430
    %v432 = vmul.f32 %v416, %v430
    %v433 = vadd.f32 %v393, %v431
    %v434 = vadd.f32 %v394, %v432
    %435 = vrot.lane.b32.xlu0 %v144, 1
    %v436 = vpop.permute.xlu0 %435
    %437 = vrot.lane.b32.xlu0 %v145, 1
    %v438 = vpop.permute.xlu0 %437
    %v439 = vsel %vm412, %v436, %v438
    %v440 = vsel %vm412, %v438, %v436
    %v441 = vmul.f32 %v440, %v401
    %v442 = vmul.f32 %v439, %v405
    %s443 = sld [smem:[#allocation2 + $0xc]]
    %v444 = vstv %s443
    %v445 = vmul.f32 %v441, %v444
    %v446 = vmul.f32 %v442, %v444
    %v447 = vadd.f32 %v421, %v445
    %v448 = vadd.f32 %v422, %v446
    %s449 = sld [smem:[#allocation2 + $0x27]]
    %v450 = vstv %s449
    %v451 = vmul.f32 %v441, %v450
    %v452 = vmul.f32 %v442, %v450
    %v453 = vadd.f32 %v427, %v451
    %v454 = vadd.f32 %v428, %v452
    %s455 = sld [smem:[#allocation2 + $0x42]]
    %v456 = vstv %s455
    %v457 = vmul.f32 %v441, %v456
    %v458 = vmul.f32 %v442, %v456
    %v459 = vadd.f32 %v433, %v457
    %v460 = vadd.f32 %v434, %v458
    %461 = vrot.lane.b32.xlu0 %v181, 1
    %v462 = vpop.permute.xlu0 %461
    %463 = vrot.lane.b32.xlu0 %v182, 1
    %v464 = vpop.permute.xlu0 %463
    %v465 = vsel %vm412, %v462, %v464
    %v466 = vsel %vm412, %v464, %v462
    %v467 = vmul.f32 %v466, %v401
    %v468 = vmul.f32 %v465, %v405
    %s469 = sld [smem:[#allocation2 + $0x15]]
    %v470 = vstv %s469
    %v471 = vmul.f32 %v467, %v470
    %v472 = vmul.f32 %v468, %v470
    %v473 = vadd.f32 %v447, %v471
    %v474 = vadd.f32 %v448, %v472
    %s475 = sld [smem:[#allocation2 + $0x30]]
    %v476 = vstv %s475
    %v477 = vmul.f32 %v467, %v476
    %v478 = vmul.f32 %v468, %v476
    %v479 = vadd.f32 %v453, %v477
    %v480 = vadd.f32 %v454, %v478
    %s481 = sld [smem:[#allocation2 + $0x4b]]
    %v482 = vstv %s481
    %v483 = vmul.f32 %v467, %v482
    %v484 = vmul.f32 %v468, %v482
    %v485 = vadd.f32 %v459, %v483
    %v486 = vadd.f32 %v460, %v484
    %s487 = sld [smem:[#allocation2 + $0x4]]
    %v488 = vstv %s487
    %v489 = vmul.f32 %v71, %v488
    %v492 = vunpack.c.l.s4 1983009808
    %v493 = vunpack.c.0.s8 %v492
    %v494 = vlaneseq
    %v495 = vshrl.u32 %v494, 7
    %v496 = vsub.s32 %v493, %v495
    %v497 = vrot.slane %v489, %v496
    %v498 = vcombine.high %v497, %v497
    %v501 = vadd.f32 %v473, %v497
    %v502 = vadd.f32 %v474, %v498
    %s503 = sld [smem:[#allocation2 + $0x1f]]
    %v504 = vstv %s503
    %v505 = vmul.f32 %v71, %v504
    %v508 = vunpack.c.l.s4 1983009808
    %v509 = vunpack.c.0.s8 %v508
    %v510 = vlaneseq
    %v511 = vshrl.u32 %v510, 7
    %v512 = vsub.s32 %v509, %v511
    %v513 = vrot.slane %v505, %v512
    %v514 = vcombine.high %v513, %v513
    %v517 = vadd.f32 %v479, %v513
    %v518 = vadd.f32 %v480, %v514
    %s519 = sld [smem:[#allocation2 + $0x3a]]
    %v520 = vstv %s519
    %v521 = vmul.f32 %v71, %v520
    %v524 = vunpack.c.l.s4 1983009808
    %v525 = vunpack.c.0.s8 %v524
    %v526 = vlaneseq
    %v527 = vshrl.u32 %v526, 7
    %v528 = vsub.s32 %v525, %v527
    %v529 = vrot.slane %v521, %v528
    %v530 = vcombine.high %v529, %v529
    %v533 = vadd.f32 %v485, %v529
    %v534 = vadd.f32 %v486, %v530
    %s535 = sld [smem:[#allocation2 + $0xd]]
    %v536 = vstv %s535
    %v537 = vmul.f32 %v73, %v536
    %v540 = vunpack.c.l.s4 1983009808
    %v541 = vunpack.c.0.s8 %v540
    %v542 = vlaneseq
    %v543 = vshrl.u32 %v542, 7
    %v544 = vsub.s32 %v541, %v543
    %v545 = vrot.slane %v537, %v544
    %v546 = vcombine.high %v545, %v545
    %v549 = vadd.f32 %v501, %v545
    %v550 = vadd.f32 %v502, %v546
    %s551 = sld [smem:[#allocation2 + $0x28]]
    %v552 = vstv %s551
    %v553 = vmul.f32 %v73, %v552
    %v556 = vunpack.c.l.s4 1983009808
    %v557 = vunpack.c.0.s8 %v556
    %v558 = vlaneseq
    %v559 = vshrl.u32 %v558, 7
    %v560 = vsub.s32 %v557, %v559
    %v561 = vrot.slane %v553, %v560
    %v562 = vcombine.high %v561, %v561
    %v565 = vadd.f32 %v517, %v561
    %v566 = vadd.f32 %v518, %v562
    %s567 = sld [smem:[#allocation2 + $0x43]]
    %v568 = vstv %s567
    %v569 = vmul.f32 %v73, %v568
    %v572 = vunpack.c.l.s4 1983009808
    %v573 = vunpack.c.0.s8 %v572
    %v574 = vlaneseq
    %v575 = vshrl.u32 %v574, 7
    %v576 = vsub.s32 %v573, %v575
    %v577 = vrot.slane %v569, %v576
    %v578 = vcombine.high %v577, %v577
    %v581 = vadd.f32 %v533, %v577
    %v582 = vadd.f32 %v534, %v578
    %s583 = sld [smem:[#allocation2 + $0x16]]
    %v584 = vstv %s583
    %v585 = vmul.f32 %v75, %v584
    %v588 = vunpack.c.l.s4 1983009808
    %v589 = vunpack.c.0.s8 %v588
    %v590 = vlaneseq
    %v591 = vshrl.u32 %v590, 7
    %v592 = vsub.s32 %v589, %v591
    %v593 = vrot.slane %v585, %v592
    %v594 = vcombine.high %v593, %v593
    %v597 = vadd.f32 %v549, %v593
    %v598 = vadd.f32 %v550, %v594
    %s599 = sld [smem:[#allocation2 + $0x31]]
    %v600 = vstv %s599
    %v601 = vmul.f32 %v75, %v600
    %v604 = vunpack.c.l.s4 1983009808
    %v605 = vunpack.c.0.s8 %v604
    %v606 = vlaneseq
    %v607 = vshrl.u32 %v606, 7
    %v608 = vsub.s32 %v605, %v607
    %v609 = vrot.slane %v601, %v608
    %v610 = vcombine.high %v609, %v609
    %v613 = vadd.f32 %v565, %v609
    %v614 = vadd.f32 %v566, %v610
    %s615 = sld [smem:[#allocation2 + $0x4c]]
    %v616 = vstv %s615
    %v617 = vmul.f32 %v75, %v616
    %v620 = vunpack.c.l.s4 1983009808
    %v621 = vunpack.c.0.s8 %v620
    %v622 = vlaneseq
    %v623 = vshrl.u32 %v622, 7
    %v624 = vsub.s32 %v621, %v623
    %v625 = vrot.slane %v617, %v624
    %v626 = vcombine.high %v625, %v625
    %v629 = vadd.f32 %v581, %v625
    %v630 = vadd.f32 %v582, %v626
    %s631 = scalar_lea.vmem %s1, 5
    %v632 = vld [vmem:[%s631] ss:$8 sm:$0x3]
    %v634 = vlaneseq
    %v635 = vshrl.u32 %v634, 7
    %v636 = vsub.s32 0, %v635
    %v637 = vrot.slane %v632, %v636
    %v638 = vlaneseq
    %v639 = vshrl.u32 %v638, 7
    %v640 = vsub.s32 1, %v639
    %v641 = vrot.slane %v632, %v640
    %644 = vrot.lane.b32.xlu0 %v104, 127
    %v645 = vpop.permute.xlu0 %644
    %646 = vrot.lane.b32.xlu0 %v105, 127
    %v647 = vpop.permute.xlu0 %646
    %vm648 = vcmp.lt.s32.totalorder %v113, 127
    %v649 = vsel %vm648, %v645, %v647
    %v650 = vsel %vm648, %v647, %v645
    %v651 = vmul.f32 %v649, %v637
    %v652 = vmul.f32 %v650, %v641
    %s653 = sld [smem:[#allocation2 + $0x5]]
    %v654 = vstv %s653
    %v655 = vmul.f32 %v651, %v654
    %v656 = vmul.f32 %v652, %v654
    %v657 = vadd.f32 %v597, %v655
    %v658 = vadd.f32 %v598, %v656
    %s659 = sld [smem:[#allocation2 + $0x20]]
    %v660 = vstv %s659
    %v661 = vmul.f32 %v651, %v660
    %v662 = vmul.f32 %v652, %v660
    %v663 = vadd.f32 %v613, %v661
    %v664 = vadd.f32 %v614, %v662
    %s665 = sld [smem:[#allocation2 + $0x3b]]
    %v666 = vstv %s665
    %v667 = vmul.f32 %v651, %v666
    %v668 = vmul.f32 %v652, %v666
    %v669 = vadd.f32 %v629, %v667
    %v670 = vadd.f32 %v630, %v668
    %671 = vrot.lane.b32.xlu0 %v144, 127
    %v672 = vpop.permute.xlu0 %671
    %673 = vrot.lane.b32.xlu0 %v145, 127
    %v674 = vpop.permute.xlu0 %673
    %v675 = vsel %vm648, %v672, %v674
    %v676 = vsel %vm648, %v674, %v672
    %v677 = vmul.f32 %v675, %v637
    %v678 = vmul.f32 %v676, %v641
    %s679 = sld [smem:[#allocation2 + $0xe]]
    %v680 = vstv %s679
    %v681 = vmul.f32 %v677, %v680
    %v682 = vmul.f32 %v678, %v680
    %v683 = vadd.f32 %v657, %v681
    %v684 = vadd.f32 %v658, %v682
    %s685 = sld [smem:[#allocation2 + $0x29]]
    %v686 = vstv %s685
    %v687 = vmul.f32 %v677, %v686
    %v688 = vmul.f32 %v678, %v686
    %v689 = vadd.f32 %v663, %v687
    %v690 = vadd.f32 %v664, %v688
    %s691 = sld [smem:[#allocation2 + $0x44]]
    %v692 = vstv %s691
    %v693 = vmul.f32 %v677, %v692
    %v694 = vmul.f32 %v678, %v692
    %v695 = vadd.f32 %v669, %v693
    %v696 = vadd.f32 %v670, %v694
    %697 = vrot.lane.b32.xlu0 %v181, 127
    %v698 = vpop.permute.xlu0 %697
    %699 = vrot.lane.b32.xlu0 %v182, 127
    %v700 = vpop.permute.xlu0 %699
    %v701 = vsel %vm648, %v698, %v700
    %v702 = vsel %vm648, %v700, %v698
    %v703 = vmul.f32 %v701, %v637
    %v704 = vmul.f32 %v702, %v641
    %s705 = sld [smem:[#allocation2 + $0x17]]
    %v706 = vstv %s705
    %v707 = vmul.f32 %v703, %v706
    %v708 = vmul.f32 %v704, %v706
    %v709 = vadd.f32 %v683, %v707
    %v710 = vadd.f32 %v684, %v708
    %s711 = sld [smem:[#allocation2 + $0x32]]
    %v712 = vstv %s711
    %v713 = vmul.f32 %v703, %v712
    %v714 = vmul.f32 %v704, %v712
    %v715 = vadd.f32 %v689, %v713
    %v716 = vadd.f32 %v690, %v714
    %s717 = sld [smem:[#allocation2 + $0x4d]]
    %v718 = vstv %s717
    %v719 = vmul.f32 %v703, %v718
    %v720 = vmul.f32 %v704, %v718
    %v721 = vadd.f32 %v695, %v719
    %v722 = vadd.f32 %v696, %v720
    %s723 = scalar_lea.vmem %s1, 6
    %v724 = vld [vmem:[%s723] ss:$8 sm:$0x3]
    %v726 = vlaneseq
    %v727 = vshrl.u32 %v726, 7
    %v728 = vsub.s32 0, %v727
    %v729 = vrot.slane %v724, %v728
    %v730 = vlaneseq
    %v731 = vshrl.u32 %v730, 7
    %v732 = vsub.s32 1, %v731
    %v733 = vrot.slane %v724, %v732
    %736 = vrot.lane.b32.xlu0 %v104, 113
    %v737 = vpop.permute.xlu0 %736
    %738 = vrot.lane.b32.xlu0 %v105, 113
    %v739 = vpop.permute.xlu0 %738
    %vm740 = vcmp.lt.s32.totalorder %v113, 113
    %v741 = vsel %vm740, %v737, %v739
    %v742 = vsel %vm740, %v739, %v737
    %v743 = vmul.f32 %v741, %v729
    %v744 = vmul.f32 %v742, %v733
    %s745 = sld [smem:[#allocation2 + $0x6]]
    %v746 = vstv %s745
    %v747 = vmul.f32 %v743, %v746
    %v748 = vmul.f32 %v744, %v746
    %v749 = vadd.f32 %v709, %v747
    %v750 = vadd.f32 %v710, %v748
    %s751 = sld [smem:[#allocation2 + $0x21]]
    %v752 = vstv %s751
    %v753 = vmul.f32 %v743, %v752
    %v754 = vmul.f32 %v744, %v752
    %v755 = vadd.f32 %v715, %v753
    %v756 = vadd.f32 %v716, %v754
    %s757 = sld [smem:[#allocation2 + $0x3c]]
    %v758 = vstv %s757
    %v759 = vmul.f32 %v743, %v758
    %v760 = vmul.f32 %v744, %v758
    %v761 = vadd.f32 %v721, %v759
    %v762 = vadd.f32 %v722, %v760
    %763 = vrot.lane.b32.xlu0 %v144, 113
    %v764 = vpop.permute.xlu0 %763
    %765 = vrot.lane.b32.xlu0 %v145, 113
    %v766 = vpop.permute.xlu0 %765
    %v767 = vsel %vm740, %v764, %v766
    %v768 = vsel %vm740, %v766, %v764
    %v769 = vmul.f32 %v767, %v729
    %v770 = vmul.f32 %v768, %v733
    %s771 = sld [smem:[#allocation2 + $0xf]]
    %v772 = vstv %s771
    %v773 = vmul.f32 %v769, %v772
    %v774 = vmul.f32 %v770, %v772
    %v775 = vadd.f32 %v749, %v773
    %v776 = vadd.f32 %v750, %v774
    %s777 = sld [smem:[#allocation2 + $0x2a]]
    %v778 = vstv %s777
    %v779 = vmul.f32 %v769, %v778
    %v780 = vmul.f32 %v770, %v778
    %v781 = vadd.f32 %v755, %v779
    %v782 = vadd.f32 %v756, %v780
    %s783 = sld [smem:[#allocation2 + $0x45]]
    %v784 = vstv %s783
    %v785 = vmul.f32 %v769, %v784
    %v786 = vmul.f32 %v770, %v784
    %v787 = vadd.f32 %v761, %v785
    %v788 = vadd.f32 %v762, %v786
    %789 = vrot.lane.b32.xlu0 %v181, 113
    %v790 = vpop.permute.xlu0 %789
    %791 = vrot.lane.b32.xlu0 %v182, 113
    %v792 = vpop.permute.xlu0 %791
    %v793 = vsel %vm740, %v790, %v792
    %v794 = vsel %vm740, %v792, %v790
    %v795 = vmul.f32 %v793, %v729
    %v796 = vmul.f32 %v794, %v733
    %s797 = sld [smem:[#allocation2 + $0x18]]
    %v798 = vstv %s797
    %v799 = vmul.f32 %v795, %v798
    %v800 = vmul.f32 %v796, %v798
    %v801 = vadd.f32 %v775, %v799
    %v802 = vadd.f32 %v776, %v800
    %s803 = sld [smem:[#allocation2 + $0x33]]
    %v804 = vstv %s803
    %v805 = vmul.f32 %v795, %v804
    %v806 = vmul.f32 %v796, %v804
    %v807 = vadd.f32 %v781, %v805
    %v808 = vadd.f32 %v782, %v806
    %s809 = sld [smem:[#allocation2 + $0x4e]]
    %v810 = vstv %s809
    %v811 = vmul.f32 %v795, %v810
    %v812 = vmul.f32 %v796, %v810
    %v813 = vadd.f32 %v787, %v811
    %v814 = vadd.f32 %v788, %v812
    %s815 = scalar_lea.vmem %s1, 7
    %v816 = vld [vmem:[%s815] ss:$8 sm:$0x3]
    %v818 = vlaneseq
    %v819 = vshrl.u32 %v818, 7
    %v820 = vsub.s32 0, %v819
    %v821 = vrot.slane %v816, %v820
    %v822 = vlaneseq
    %v823 = vshrl.u32 %v822, 7
    %v824 = vsub.s32 1, %v823
    %v825 = vrot.slane %v816, %v824
    %828 = vrot.lane.b32.xlu0 %v104, 112
    %v829 = vpop.permute.xlu0 %828
    %830 = vrot.lane.b32.xlu0 %v105, 112
    %v831 = vpop.permute.xlu0 %830
    %vm832 = vcmp.lt.s32.totalorder %v113, 112
    %v833 = vsel %vm832, %v829, %v831
    %v834 = vsel %vm832, %v831, %v829
    %v835 = vmul.f32 %v833, %v821
    %v836 = vmul.f32 %v834, %v825
    %s837 = sld [smem:[#allocation2 + $0x7]]
    %v838 = vstv %s837
    %v839 = vmul.f32 %v835, %v838
    %v840 = vmul.f32 %v836, %v838
    %v841 = vadd.f32 %v801, %v839
    %v842 = vadd.f32 %v802, %v840
    %s843 = sld [smem:[#allocation2 + $0x22]]
    %v844 = vstv %s843
    %v845 = vmul.f32 %v835, %v844
    %v846 = vmul.f32 %v836, %v844
    %v847 = vadd.f32 %v807, %v845
    %v848 = vadd.f32 %v808, %v846
    %s849 = sld [smem:[#allocation2 + $0x3d]]
    %v850 = vstv %s849
    %v851 = vmul.f32 %v835, %v850
    %v852 = vmul.f32 %v836, %v850
    %v853 = vadd.f32 %v813, %v851
    %v854 = vadd.f32 %v814, %v852
    %855 = vrot.lane.b32.xlu0 %v144, 112
    %v856 = vpop.permute.xlu0 %855
    %857 = vrot.lane.b32.xlu0 %v145, 112
    %v858 = vpop.permute.xlu0 %857
    %v859 = vsel %vm832, %v856, %v858
    %v860 = vsel %vm832, %v858, %v856
    %v861 = vmul.f32 %v859, %v821
    %v862 = vmul.f32 %v860, %v825
    %s863 = sld [smem:[#allocation2 + $0x10]]
    %v864 = vstv %s863
    %v865 = vmul.f32 %v861, %v864
    %v866 = vmul.f32 %v862, %v864
    %v867 = vadd.f32 %v841, %v865
    %v868 = vadd.f32 %v842, %v866
    %s869 = sld [smem:[#allocation2 + $0x2b]]
    %v870 = vstv %s869
    %v871 = vmul.f32 %v861, %v870
    %v872 = vmul.f32 %v862, %v870
    %v873 = vadd.f32 %v847, %v871
    %v874 = vadd.f32 %v848, %v872
    %s875 = sld [smem:[#allocation2 + $0x46]]
    %v876 = vstv %s875
    %v877 = vmul.f32 %v861, %v876
    %v878 = vmul.f32 %v862, %v876
    %v879 = vadd.f32 %v853, %v877
    %v880 = vadd.f32 %v854, %v878
    %881 = vrot.lane.b32.xlu0 %v181, 112
    %v882 = vpop.permute.xlu0 %881
    %883 = vrot.lane.b32.xlu0 %v182, 112
    %v884 = vpop.permute.xlu0 %883
    %v885 = vsel %vm832, %v882, %v884
    %v886 = vsel %vm832, %v884, %v882
    %v887 = vmul.f32 %v885, %v821
    %v888 = vmul.f32 %v886, %v825
    %s889 = sld [smem:[#allocation2 + $0x19]]
    %v890 = vstv %s889
    %v891 = vmul.f32 %v887, %v890
    %v892 = vmul.f32 %v888, %v890
    %v893 = vadd.f32 %v867, %v891
    %v894 = vadd.f32 %v868, %v892
    %s895 = sld [smem:[#allocation2 + $0x34]]
    %v896 = vstv %s895
    %v897 = vmul.f32 %v887, %v896
    %v898 = vmul.f32 %v888, %v896
    %v899 = vadd.f32 %v873, %v897
    %v900 = vadd.f32 %v874, %v898
    %s901 = sld [smem:[#allocation2 + $0x4f]]
    %v902 = vstv %s901
    %v903 = vmul.f32 %v887, %v902
    %v904 = vmul.f32 %v888, %v902
    %v905 = vadd.f32 %v879, %v903
    %v906 = vadd.f32 %v880, %v904
    %s907 = scalar_lea.vmem %s1, 16
    %v908 = vld [vmem:[%s907] ss:$8 sm:$0x3]
    %v910 = vlaneseq
    %v911 = vshrl.u32 %v910, 7
    %v912 = vsub.s32 0, %v911
    %v913 = vrot.slane %v908, %v912
    %v914 = vlaneseq
    %v915 = vshrl.u32 %v914, 7
    %v916 = vsub.s32 1, %v915
    %v917 = vrot.slane %v908, %v916
    %920 = vrot.lane.b32.xlu0 %v104, 111
    %v921 = vpop.permute.xlu0 %920
    %922 = vrot.lane.b32.xlu0 %v105, 111
    %v923 = vpop.permute.xlu0 %922
    %vm924 = vcmp.lt.s32.totalorder %v113, 111
    %v925 = vsel %vm924, %v921, %v923
    %v926 = vsel %vm924, %v923, %v921
    %v927 = vmul.f32 %v925, %v913
    %v928 = vmul.f32 %v926, %v917
    %s929 = sld [smem:[#allocation2 + $0x8]]
    %v930 = vstv %s929
    %v931 = vmul.f32 %v927, %v930
    %v932 = vmul.f32 %v928, %v930
    %v933 = vadd.f32 %v893, %v931
    %v934 = vadd.f32 %v894, %v932
    %s935 = sld [smem:[#allocation2 + $0x23]]
    %v936 = vstv %s935
    %v937 = vmul.f32 %v927, %v936
    %v938 = vmul.f32 %v928, %v936
    %v939 = vadd.f32 %v899, %v937
    %v940 = vadd.f32 %v900, %v938
    %s941 = sld [smem:[#allocation2 + $0x3e]]
    %v942 = vstv %s941
    %v943 = vmul.f32 %v927, %v942
    %v944 = vmul.f32 %v928, %v942
    %v945 = vadd.f32 %v905, %v943
    %v946 = vadd.f32 %v906, %v944
    %947 = vrot.lane.b32.xlu0 %v144, 111
    %v948 = vpop.permute.xlu0 %947
    %949 = vrot.lane.b32.xlu0 %v145, 111
    %v950 = vpop.permute.xlu0 %949
    %v951 = vsel %vm924, %v948, %v950
    %v952 = vsel %vm924, %v950, %v948
    %v953 = vmul.f32 %v951, %v913
    %v954 = vmul.f32 %v952, %v917
    %s955 = sld [smem:[#allocation2 + $0x11]]
    %v956 = vstv %s955
    %v957 = vmul.f32 %v953, %v956
    %v958 = vmul.f32 %v954, %v956
    %v959 = vadd.f32 %v933, %v957
    %v960 = vadd.f32 %v934, %v958
    %s961 = sld [smem:[#allocation2 + $0x2c]]
    %v962 = vstv %s961
    %v963 = vmul.f32 %v953, %v962
    %v964 = vmul.f32 %v954, %v962
    %v965 = vadd.f32 %v939, %v963
    %v966 = vadd.f32 %v940, %v964
    %s967 = sld [smem:[#allocation2 + $0x47]]
    %v968 = vstv %s967
    %v969 = vmul.f32 %v953, %v968
    %v970 = vmul.f32 %v954, %v968
    %v971 = vadd.f32 %v945, %v969
    %v972 = vadd.f32 %v946, %v970
    %973 = vrot.lane.b32.xlu0 %v181, 111
    %v974 = vpop.permute.xlu0 %973
    %975 = vrot.lane.b32.xlu0 %v182, 111
    %v976 = vpop.permute.xlu0 %975
    %v977 = vsel %vm924, %v974, %v976
    %v978 = vsel %vm924, %v976, %v974
    %v979 = vmul.f32 %v977, %v913
    %v980 = vmul.f32 %v978, %v917
    %s981 = sld [smem:[#allocation2 + $0x1a]]
    %v982 = vstv %s981
    %v983 = vmul.f32 %v979, %v982
    %v984 = vmul.f32 %v980, %v982
    %v985 = vadd.f32 %v959, %v983
    %v986 = vadd.f32 %v960, %v984
    %s987 = sld [smem:[#allocation2 + $0x35]]
    %v988 = vstv %s987
    %v989 = vmul.f32 %v979, %v988
    %v990 = vmul.f32 %v980, %v988
    %v991 = vadd.f32 %v965, %v989
    %v992 = vadd.f32 %v966, %v990
    %s993 = sld [smem:[#allocation2 + $0x50]]
    %v994 = vstv %s993
    %v995 = vmul.f32 %v979, %v994
    %v996 = vmul.f32 %v980, %v994
    %v997 = vadd.f32 %v971, %v995
    %v998 = vadd.f32 %v972, %v996
    %v999 = vmax.f32 %v985, 0.0
    %v1000 = vmax.f32 %v986, 0.0
    %v1001 = vmax.f32 %v991, 0.0
    %v1002 = vmax.f32 %v992, 0.0
    %v1003 = vmax.f32 %v997, 0.0
    %v1004 = vmax.f32 %v998, 0.0
    %s1005 = sld [smem:[#allocation7]]
    %v1006 = vstv %s1005
    %v1007 = vadd.f32 %v1006, 0.0
    %s1008 = sld [smem:[#allocation7 + $0x1]]
    %v1009 = vstv %s1008
    %v1010 = vadd.f32 %v1009, 0.0
    %s1011 = sld [smem:[#allocation7 + $0x2]]
    %v1012 = vstv %s1011
    %v1013 = vadd.f32 %v1012, 0.0
    %1014 = vrot.lane.b32.xlu0 %v999, 17
    %v1015 = vpop.permute.xlu0 %1014
    %1016 = vrot.lane.b32.xlu0 %v1000, 17
    %v1017 = vpop.permute.xlu0 %1016
    %v1018 = vsel %vm114, %v1015, %v1017
    %v1019 = vsel %vm114, %v1017, %v1015
    %v1020 = vmul.f32 %v1019, %v90
    %v1021 = vmul.f32 %v1018, %v94
    %s1022 = sld [smem:[#allocation6]]
    %v1023 = vstv %s1022
    %v1024 = vmul.f32 %v1020, %v1023
    %v1025 = vmul.f32 %v1021, %v1023
    %v1026 = vadd.f32 %v1007, %v1024
    %v1027 = vadd.f32 %v1007, %v1025
    %s1028 = sld [smem:[#allocation6 + $0x1b]]
    %v1029 = vstv %s1028
    %v1030 = vmul.f32 %v1020, %v1029
    %v1031 = vmul.f32 %v1021, %v1029
    %v1032 = vadd.f32 %v1010, %v1030
    %v1033 = vadd.f32 %v1010, %v1031
    %s1034 = sld [smem:[#allocation6 + $0x36]]
    %v1035 = vstv %s1034
    %v1036 = vmul.f32 %v1020, %v1035
    %v1037 = vmul.f32 %v1021, %v1035
    %v1038 = vadd.f32 %v1013, %v1036
    %v1039 = vadd.f32 %v1013, %v1037
    %1040 = vrot.lane.b32.xlu0 %v1001, 17
    %v1041 = vpop.permute.xlu0 %1040
    %1042 = vrot.lane.b32.xlu0 %v1002, 17
    %v1043 = vpop.permute.xlu0 %1042
    %v1044 = vsel %vm114, %v1041, %v1043
    %v1045 = vsel %vm114, %v1043, %v1041
    %v1046 = vmul.f32 %v1045, %v90
    %v1047 = vmul.f32 %v1044, %v94
    %s1048 = sld [smem:[#allocation6 + $0x9]]
    %v1049 = vstv %s1048
    %v1050 = vmul.f32 %v1046, %v1049
    %v1051 = vmul.f32 %v1047, %v1049
    %v1052 = vadd.f32 %v1026, %v1050
    %v1053 = vadd.f32 %v1027, %v1051
    %s1054 = sld [smem:[#allocation6 + $0x24]]
    %v1055 = vstv %s1054
    %v1056 = vmul.f32 %v1046, %v1055
    %v1057 = vmul.f32 %v1047, %v1055
    %v1058 = vadd.f32 %v1032, %v1056
    %v1059 = vadd.f32 %v1033, %v1057
    %s1060 = sld [smem:[#allocation6 + $0x3f]]
    %v1061 = vstv %s1060
    %v1062 = vmul.f32 %v1046, %v1061
    %v1063 = vmul.f32 %v1047, %v1061
    %v1064 = vadd.f32 %v1038, %v1062
    %v1065 = vadd.f32 %v1039, %v1063
    %1066 = vrot.lane.b32.xlu0 %v1003, 17
    %v1067 = vpop.permute.xlu0 %1066
    %1068 = vrot.lane.b32.xlu0 %v1004, 17
    %v1069 = vpop.permute.xlu0 %1068
    %v1070 = vsel %vm114, %v1067, %v1069
    %v1071 = vsel %vm114, %v1069, %v1067
    %v1072 = vmul.f32 %v1071, %v90
    %v1073 = vmul.f32 %v1070, %v94
    %s1074 = sld [smem:[#allocation6 + $0x12]]
    %v1075 = vstv %s1074
    %v1076 = vmul.f32 %v1072, %v1075
    %v1077 = vmul.f32 %v1073, %v1075
    %v1078 = vadd.f32 %v1052, %v1076
    %v1079 = vadd.f32 %v1053, %v1077
    %s1080 = sld [smem:[#allocation6 + $0x2d]]
    %v1081 = vstv %s1080
    %v1082 = vmul.f32 %v1072, %v1081
    %v1083 = vmul.f32 %v1073, %v1081
    %v1084 = vadd.f32 %v1058, %v1082
    %v1085 = vadd.f32 %v1059, %v1083
    %s1086 = sld [smem:[#allocation6 + $0x48]]
    %v1087 = vstv %s1086
    %v1088 = vmul.f32 %v1072, %v1087
    %v1089 = vmul.f32 %v1073, %v1087
    %v1090 = vadd.f32 %v1064, %v1088
    %v1091 = vadd.f32 %v1065, %v1089
    %1092 = vrot.lane.b32.xlu0 %v999, 16
    %v1093 = vpop.permute.xlu0 %1092
    %1094 = vrot.lane.b32.xlu0 %v1000, 16
    %v1095 = vpop.permute.xlu0 %1094
    %v1096 = vsel %vm228, %v1093, %v1095
    %v1097 = vsel %vm228, %v1095, %v1093
    %v1098 = vmul.f32 %v1097, %v217
    %v1099 = vmul.f32 %v1096, %v221
    %s1100 = sld [smem:[#allocation6 + $0x1]]
    %v1101 = vstv %s1100
    %v1102 = vmul.f32 %v1098, %v1101
    %v1103 = vmul.f32 %v1099, %v1101
    %v1104 = vadd.f32 %v1078, %v1102
    %v1105 = vadd.f32 %v1079, %v1103
    %s1106 = sld [smem:[#allocation6 + $0x1c]]
    %v1107 = vstv %s1106
    %v1108 = vmul.f32 %v1098, %v1107
    %v1109 = vmul.f32 %v1099, %v1107
    %v1110 = vadd.f32 %v1084, %v1108
    %v1111 = vadd.f32 %v1085, %v1109
    %s1112 = sld [smem:[#allocation6 + $0x37]]
    %v1113 = vstv %s1112
    %v1114 = vmul.f32 %v1098, %v1113
    %v1115 = vmul.f32 %v1099, %v1113
    %v1116 = vadd.f32 %v1090, %v1114
    %v1117 = vadd.f32 %v1091, %v1115
    %1118 = vrot.lane.b32.xlu0 %v1001, 16
    %v1119 = vpop.permute.xlu0 %1118
    %1120 = vrot.lane.b32.xlu0 %v1002, 16
    %v1121 = vpop.permute.xlu0 %1120
    %v1122 = vsel %vm228, %v1119, %v1121
    %v1123 = vsel %vm228, %v1121, %v1119
    %v1124 = vmul.f32 %v1123, %v217
    %v1125 = vmul.f32 %v1122, %v221
    %s1126 = sld [smem:[#allocation6 + $0xa]]
    %v1127 = vstv %s1126
    %v1128 = vmul.f32 %v1124, %v1127
    %v1129 = vmul.f32 %v1125, %v1127
    %v1130 = vadd.f32 %v1104, %v1128
    %v1131 = vadd.f32 %v1105, %v1129
    %s1132 = sld [smem:[#allocation6 + $0x25]]
    %v1133 = vstv %s1132
    %v1134 = vmul.f32 %v1124, %v1133
    %v1135 = vmul.f32 %v1125, %v1133
    %v1136 = vadd.f32 %v1110, %v1134
    %v1137 = vadd.f32 %v1111, %v1135
    %s1138 = sld [smem:[#allocation6 + $0x40]]
    %v1139 = vstv %s1138
    %v1140 = vmul.f32 %v1124, %v1139
    %v1141 = vmul.f32 %v1125, %v1139
    %v1142 = vadd.f32 %v1116, %v1140
    %v1143 = vadd.f32 %v1117, %v1141
    %1144 = vrot.lane.b32.xlu0 %v1003, 16
    %v1145 = vpop.permute.xlu0 %1144
    %1146 = vrot.lane.b32.xlu0 %v1004, 16
    %v1147 = vpop.permute.xlu0 %1146
    %v1148 = vsel %vm228, %v1145, %v1147
    %v1149 = vsel %vm228, %v1147, %v1145
    %v1150 = vmul.f32 %v1149, %v217
    %v1151 = vmul.f32 %v1148, %v221
    %s1152 = sld [smem:[#allocation6 + $0x13]]
    %v1153 = vstv %s1152
    %v1154 = vmul.f32 %v1150, %v1153
    %v1155 = vmul.f32 %v1151, %v1153
    %v1156 = vadd.f32 %v1130, %v1154
    %v1157 = vadd.f32 %v1131, %v1155
    %s1158 = sld [smem:[#allocation6 + $0x2e]]
    %v1159 = vstv %s1158
    %v1160 = vmul.f32 %v1150, %v1159
    %v1161 = vmul.f32 %v1151, %v1159
    %v1162 = vadd.f32 %v1136, %v1160
    %v1163 = vadd.f32 %v1137, %v1161
    %s1164 = sld [smem:[#allocation6 + $0x49]]
    %v1165 = vstv %s1164
    %v1166 = vmul.f32 %v1150, %v1165
    %v1167 = vmul.f32 %v1151, %v1165
    %v1168 = vadd.f32 %v1142, %v1166
    %v1169 = vadd.f32 %v1143, %v1167
    %1170 = vrot.lane.b32.xlu0 %v999, 15
    %v1171 = vpop.permute.xlu0 %1170
    %1172 = vrot.lane.b32.xlu0 %v1000, 15
    %v1173 = vpop.permute.xlu0 %1172
    %v1174 = vsel %vm320, %v1171, %v1173
    %v1175 = vsel %vm320, %v1173, %v1171
    %v1176 = vmul.f32 %v1175, %v309
    %v1177 = vmul.f32 %v1174, %v313
    %s1178 = sld [smem:[#allocation6 + $0x2]]
    %v1179 = vstv %s1178
    %v1180 = vmul.f32 %v1176, %v1179
    %v1181 = vmul.f32 %v1177, %v1179
    %v1182 = vadd.f32 %v1156, %v1180
    %v1183 = vadd.f32 %v1157, %v1181
    %s1184 = sld [smem:[#allocation6 + $0x1d]]
    %v1185 = vstv %s1184
    %v1186 = vmul.f32 %v1176, %v1185
    %v1187 = vmul.f32 %v1177, %v1185
    %v1188 = vadd.f32 %v1162, %v1186
    %v1189 = vadd.f32 %v1163, %v1187
    %s1190 = sld [smem:[#allocation6 + $0x38]]
    %v1191 = vstv %s1190
    %v1192 = vmul.f32 %v1176, %v1191
    %v1193 = vmul.f32 %v1177, %v1191
    %v1194 = vadd.f32 %v1168, %v1192
    %v1195 = vadd.f32 %v1169, %v1193
    %1196 = vrot.lane.b32.xlu0 %v1001, 15
    %v1197 = vpop.permute.xlu0 %1196
    %1198 = vrot.lane.b32.xlu0 %v1002, 15
    %v1199 = vpop.permute.xlu0 %1198
    %v1200 = vsel %vm320, %v1197, %v1199
    %v1201 = vsel %vm320, %v1199, %v1197
    %v1202 = vmul.f32 %v1201, %v309
    %v1203 = vmul.f32 %v1200, %v313
    %s1204 = sld [smem:[#allocation6 + $0xb]]
    %v1205 = vstv %s1204
    %v1206 = vmul.f32 %v1202, %v1205
    %v1207 = vmul.f32 %v1203, %v1205
    %v1208 = vadd.f32 %v1182, %v1206
    %v1209 = vadd.f32 %v1183, %v1207
    %s1210 = sld [smem:[#allocation6 + $0x26]]
    %v1211 = vstv %s1210
    %v1212 = vmul.f32 %v1202, %v1211
    %v1213 = vmul.f32 %v1203, %v1211
    %v1214 = vadd.f32 %v1188, %v1212
    %v1215 = vadd.f32 %v1189, %v1213
    %s1216 = sld [smem:[#allocation6 + $0x41]]
    %v1217 = vstv %s1216
    %v1218 = vmul.f32 %v1202, %v1217
    %v1219 = vmul.f32 %v1203, %v1217
    %v1220 = vadd.f32 %v1194, %v1218
    %v1221 = vadd.f32 %v1195, %v1219
    %1222 = vrot.lane.b32.xlu0 %v1003, 15
    %v1223 = vpop.permute.xlu0 %1222
    %1224 = vrot.lane.b32.xlu0 %v1004, 15
    %v1225 = vpop.permute.xlu0 %1224
    %v1226 = vsel %vm320, %v1223, %v1225
    %v1227 = vsel %vm320, %v1225, %v1223
    %v1228 = vmul.f32 %v1227, %v309
    %v1229 = vmul.f32 %v1226, %v313
    %s1230 = sld [smem:[#allocation6 + $0x14]]
    %v1231 = vstv %s1230
    %v1232 = vmul.f32 %v1228, %v1231
    %v1233 = vmul.f32 %v1229, %v1231
    %v1234 = vadd.f32 %v1208, %v1232
    %v1235 = vadd.f32 %v1209, %v1233
    %s1236 = sld [smem:[#allocation6 + $0x2f]]
    %v1237 = vstv %s1236
    %v1238 = vmul.f32 %v1228, %v1237
    %v1239 = vmul.f32 %v1229, %v1237
    %v1240 = vadd.f32 %v1214, %v1238
    %v1241 = vadd.f32 %v1215, %v1239
    %s1242 = sld [smem:[#allocation6 + $0x4a]]
    %v1243 = vstv %s1242
    %v1244 = vmul.f32 %v1228, %v1243
    %v1245 = vmul.f32 %v1229, %v1243
    %v1246 = vadd.f32 %v1220, %v1244
    %v1247 = vadd.f32 %v1221, %v1245
    %1248 = vrot.lane.b32.xlu0 %v999, 1
    %v1249 = vpop.permute.xlu0 %1248
    %1250 = vrot.lane.b32.xlu0 %v1000, 1
    %v1251 = vpop.permute.xlu0 %1250
    %v1252 = vsel %vm412, %v1249, %v1251
    %v1253 = vsel %vm412, %v1251, %v1249
    %v1254 = vmul.f32 %v1253, %v401
    %v1255 = vmul.f32 %v1252, %v405
    %s1256 = sld [smem:[#allocation6 + $0x3]]
    %v1257 = vstv %s1256
    %v1258 = vmul.f32 %v1254, %v1257
    %v1259 = vmul.f32 %v1255, %v1257
    %v1260 = vadd.f32 %v1234, %v1258
    %v1261 = vadd.f32 %v1235, %v1259
    %s1262 = sld [smem:[#allocation6 + $0x1e]]
    %v1263 = vstv %s1262
    %v1264 = vmul.f32 %v1254, %v1263
    %v1265 = vmul.f32 %v1255, %v1263
    %v1266 = vadd.f32 %v1240, %v1264
    %v1267 = vadd.f32 %v1241, %v1265
    %s1268 = sld [smem:[#allocation6 + $0x39]]
    %v1269 = vstv %s1268
    %v1270 = vmul.f32 %v1254, %v1269
    %v1271 = vmul.f32 %v1255, %v1269
    %v1272 = vadd.f32 %v1246, %v1270
    %v1273 = vadd.f32 %v1247, %v1271
    %1274 = vrot.lane.b32.xlu0 %v1001, 1
    %v1275 = vpop.permute.xlu0 %1274
    %1276 = vrot.lane.b32.xlu0 %v1002, 1
    %v1277 = vpop.permute.xlu0 %1276
    %v1278 = vsel %vm412, %v1275, %v1277
    %v1279 = vsel %vm412, %v1277, %v1275
    %v1280 = vmul.f32 %v1279, %v401
    %v1281 = vmul.f32 %v1278, %v405
    %s1282 = sld [smem:[#allocation6 + $0xc]]
    %v1283 = vstv %s1282
    %v1284 = vmul.f32 %v1280, %v1283
    %v1285 = vmul.f32 %v1281, %v1283
    %v1286 = vadd.f32 %v1260, %v1284
    %v1287 = vadd.f32 %v1261, %v1285
    %s1288 = sld [smem:[#allocation6 + $0x27]]
    %v1289 = vstv %s1288
    %v1290 = vmul.f32 %v1280, %v1289
    %v1291 = vmul.f32 %v1281, %v1289
    %v1292 = vadd.f32 %v1266, %v1290
    %v1293 = vadd.f32 %v1267, %v1291
    %s1294 = sld [smem:[#allocation6 + $0x42]]
    %v1295 = vstv %s1294
    %v1296 = vmul.f32 %v1280, %v1295
    %v1297 = vmul.f32 %v1281, %v1295
    %v1298 = vadd.f32 %v1272, %v1296
    %v1299 = vadd.f32 %v1273, %v1297
    %1300 = vrot.lane.b32.xlu0 %v1003, 1
    %v1301 = vpop.permute.xlu0 %1300
    %1302 = vrot.lane.b32.xlu0 %v1004, 1
    %v1303 = vpop.permute.xlu0 %1302
    %v1304 = vsel %vm412, %v1301, %v1303
    %v1305 = vsel %vm412, %v1303, %v1301
    %v1306 = vmul.f32 %v1305, %v401
    %v1307 = vmul.f32 %v1304, %v405
    %s1308 = sld [smem:[#allocation6 + $0x15]]
    %v1309 = vstv %s1308
    %v1310 = vmul.f32 %v1306, %v1309
    %v1311 = vmul.f32 %v1307, %v1309
    %v1312 = vadd.f32 %v1286, %v1310
    %v1313 = vadd.f32 %v1287, %v1311
    %s1314 = sld [smem:[#allocation6 + $0x30]]
    %v1315 = vstv %s1314
    %v1316 = vmul.f32 %v1306, %v1315
    %v1317 = vmul.f32 %v1307, %v1315
    %v1318 = vadd.f32 %v1292, %v1316
    %v1319 = vadd.f32 %v1293, %v1317
    %s1320 = sld [smem:[#allocation6 + $0x4b]]
    %v1321 = vstv %s1320
    %v1322 = vmul.f32 %v1306, %v1321
    %v1323 = vmul.f32 %v1307, %v1321
    %v1324 = vadd.f32 %v1298, %v1322
    %v1325 = vadd.f32 %v1299, %v1323
    %s1326 = sld [smem:[#allocation6 + $0x4]]
    %v1327 = vstv %s1326
    %v1328 = vmul.f32 %v999, %v1327
    %v1329 = vmul.f32 %v1000, %v1327
    %v1330 = vadd.f32 %v1312, %v1328
    %v1331 = vadd.f32 %v1313, %v1329
    %s1332 = sld [smem:[#allocation6 + $0x1f]]
    %v1333 = vstv %s1332
    %v1334 = vmul.f32 %v999, %v1333
    %v1335 = vmul.f32 %v1000, %v1333
    %v1336 = vadd.f32 %v1318, %v1334
    %v1337 = vadd.f32 %v1319, %v1335
    %s1338 = sld [smem:[#allocation6 + $0x3a]]
    %v1339 = vstv %s1338
    %v1340 = vmul.f32 %v999, %v1339
    %v1341 = vmul.f32 %v1000, %v1339
    %v1342 = vadd.f32 %v1324, %v1340
    %v1343 = vadd.f32 %v1325, %v1341
    %s1344 = sld [smem:[#allocation6 + $0xd]]
    %v1345 = vstv %s1344
    %v1346 = vmul.f32 %v1001, %v1345
    %v1347 = vmul.f32 %v1002, %v1345
    %v1348 = vadd.f32 %v1330, %v1346
    %v1349 = vadd.f32 %v1331, %v1347
    %s1350 = sld [smem:[#allocation6 + $0x28]]
    %v1351 = vstv %s1350
    %v1352 = vmul.f32 %v1001, %v1351
    %v1353 = vmul.f32 %v1002, %v1351
    %v1354 = vadd.f32 %v1336, %v1352
    %v1355 = vadd.f32 %v1337, %v1353
    %s1356 = sld [smem:[#allocation6 + $0x43]]
    %v1357 = vstv %s1356
    %v1358 = vmul.f32 %v1001, %v1357
    %v1359 = vmul.f32 %v1002, %v1357
    %v1360 = vadd.f32 %v1342, %v1358
    %v1361 = vadd.f32 %v1343, %v1359
    %s1362 = sld [smem:[#allocation6 + $0x16]]
    %v1363 = vstv %s1362
    %v1364 = vmul.f32 %v1003, %v1363
    %v1365 = vmul.f32 %v1004, %v1363
    %v1366 = vadd.f32 %v1348, %v1364
    %v1367 = vadd.f32 %v1349, %v1365
    %s1368 = sld [smem:[#allocation6 + $0x31]]
    %v1369 = vstv %s1368
    %v1370 = vmul.f32 %v1003, %v1369
    %v1371 = vmul.f32 %v1004, %v1369
    %v1372 = vadd.f32 %v1354, %v1370
    %v1373 = vadd.f32 %v1355, %v1371
    %s1374 = sld [smem:[#allocation6 + $0x4c]]
    %v1375 = vstv %s1374
    %v1376 = vmul.f32 %v1003, %v1375
    %v1377 = vmul.f32 %v1004, %v1375
    %v1378 = vadd.f32 %v1360, %v1376
    %v1379 = vadd.f32 %v1361, %v1377
    %1380 = vrot.lane.b32.xlu0 %v999, 127
    %v1381 = vpop.permute.xlu0 %1380
    %1382 = vrot.lane.b32.xlu0 %v1000, 127
    %v1383 = vpop.permute.xlu0 %1382
    %v1384 = vsel %vm648, %v1381, %v1383
    %v1385 = vsel %vm648, %v1383, %v1381
    %v1386 = vmul.f32 %v1384, %v637
    %v1387 = vmul.f32 %v1385, %v641
    %s1388 = sld [smem:[#allocation6 + $0x5]]
    %v1389 = vstv %s1388
    %v1390 = vmul.f32 %v1386, %v1389
    %v1391 = vmul.f32 %v1387, %v1389
    %v1392 = vadd.f32 %v1366, %v1390
    %v1393 = vadd.f32 %v1367, %v1391
    %s1394 = sld [smem:[#allocation6 + $0x20]]
    %v1395 = vstv %s1394
    %v1396 = vmul.f32 %v1386, %v1395
    %v1397 = vmul.f32 %v1387, %v1395
    %v1398 = vadd.f32 %v1372, %v1396
    %v1399 = vadd.f32 %v1373, %v1397
    %s1400 = sld [smem:[#allocation6 + $0x3b]]
    %v1401 = vstv %s1400
    %v1402 = vmul.f32 %v1386, %v1401
    %v1403 = vmul.f32 %v1387, %v1401
    %v1404 = vadd.f32 %v1378, %v1402
    %v1405 = vadd.f32 %v1379, %v1403
    %1406 = vrot.lane.b32.xlu0 %v1001, 127
    %v1407 = vpop.permute.xlu0 %1406
    %1408 = vrot.lane.b32.xlu0 %v1002, 127
    %v1409 = vpop.permute.xlu0 %1408
    %v1410 = vsel %vm648, %v1407, %v1409
    %v1411 = vsel %vm648, %v1409, %v1407
    %v1412 = vmul.f32 %v1410, %v637
    %v1413 = vmul.f32 %v1411, %v641
    %s1414 = sld [smem:[#allocation6 + $0xe]]
    %v1415 = vstv %s1414
    %v1416 = vmul.f32 %v1412, %v1415
    %v1417 = vmul.f32 %v1413, %v1415
    %v1418 = vadd.f32 %v1392, %v1416
    %v1419 = vadd.f32 %v1393, %v1417
    %s1420 = sld [smem:[#allocation6 + $0x29]]
    %v1421 = vstv %s1420
    %v1422 = vmul.f32 %v1412, %v1421
    %v1423 = vmul.f32 %v1413, %v1421
    %v1424 = vadd.f32 %v1398, %v1422
    %v1425 = vadd.f32 %v1399, %v1423
    %s1426 = sld [smem:[#allocation6 + $0x44]]
    %v1427 = vstv %s1426
    %v1428 = vmul.f32 %v1412, %v1427
    %v1429 = vmul.f32 %v1413, %v1427
    %v1430 = vadd.f32 %v1404, %v1428
    %v1431 = vadd.f32 %v1405, %v1429
    %1432 = vrot.lane.b32.xlu0 %v1003, 127
    %v1433 = vpop.permute.xlu0 %1432
    %1434 = vrot.lane.b32.xlu0 %v1004, 127
    %v1435 = vpop.permute.xlu0 %1434
    %v1436 = vsel %vm648, %v1433, %v1435
    %v1437 = vsel %vm648, %v1435, %v1433
    %v1438 = vmul.f32 %v1436, %v637
    %v1439 = vmul.f32 %v1437, %v641
    %s1440 = sld [smem:[#allocation6 + $0x17]]
    %v1441 = vstv %s1440
    %v1442 = vmul.f32 %v1438, %v1441
    %v1443 = vmul.f32 %v1439, %v1441
    %v1444 = vadd.f32 %v1418, %v1442
    %v1445 = vadd.f32 %v1419, %v1443
    %s1446 = sld [smem:[#allocation6 + $0x32]]
    %v1447 = vstv %s1446
    %v1448 = vmul.f32 %v1438, %v1447
    %v1449 = vmul.f32 %v1439, %v1447
    %v1450 = vadd.f32 %v1424, %v1448
    %v1451 = vadd.f32 %v1425, %v1449
    %s1452 = sld [smem:[#allocation6 + $0x4d]]
    %v1453 = vstv %s1452
    %v1454 = vmul.f32 %v1438, %v1453
    %v1455 = vmul.f32 %v1439, %v1453
    %v1456 = vadd.f32 %v1430, %v1454
    %v1457 = vadd.f32 %v1431, %v1455
    %1458 = vrot.lane.b32.xlu0 %v999, 113
    %v1459 = vpop.permute.xlu0 %1458
    %1460 = vrot.lane.b32.xlu0 %v1000, 113
    %v1461 = vpop.permute.xlu0 %1460
    %v1462 = vsel %vm740, %v1459, %v1461
    %v1463 = vsel %vm740, %v1461, %v1459
    %v1464 = vmul.f32 %v1462, %v729
    %v1465 = vmul.f32 %v1463, %v733
    %s1466 = sld [smem:[#allocation6 + $0x6]]
    %v1467 = vstv %s1466
    %v1468 = vmul.f32 %v1464, %v1467
    %v1469 = vmul.f32 %v1465, %v1467
    %v1470 = vadd.f32 %v1444, %v1468
    %v1471 = vadd.f32 %v1445, %v1469
    %s1472 = sld [smem:[#allocation6 + $0x21]]
    %v1473 = vstv %s1472
    %v1474 = vmul.f32 %v1464, %v1473
    %v1475 = vmul.f32 %v1465, %v1473
    %v1476 = vadd.f32 %v1450, %v1474
    %v1477 = vadd.f32 %v1451, %v1475
    %s1478 = sld [smem:[#allocation6 + $0x3c]]
    %v1479 = vstv %s1478
    %v1480 = vmul.f32 %v1464, %v1479
    %v1481 = vmul.f32 %v1465, %v1479
    %v1482 = vadd.f32 %v1456, %v1480
    %v1483 = vadd.f32 %v1457, %v1481
    %1484 = vrot.lane.b32.xlu0 %v1001, 113
    %v1485 = vpop.permute.xlu0 %1484
    %1486 = vrot.lane.b32.xlu0 %v1002, 113
    %v1487 = vpop.permute.xlu0 %1486
    %v1488 = vsel %vm740, %v1485, %v1487
    %v1489 = vsel %vm740, %v1487, %v1485
    %v1490 = vmul.f32 %v1488, %v729
    %v1491 = vmul.f32 %v1489, %v733
    %s1492 = sld [smem:[#allocation6 + $0xf]]
    %v1493 = vstv %s1492
    %v1494 = vmul.f32 %v1490, %v1493
    %v1495 = vmul.f32 %v1491, %v1493
    %v1496 = vadd.f32 %v1470, %v1494
    %v1497 = vadd.f32 %v1471, %v1495
    %s1498 = sld [smem:[#allocation6 + $0x2a]]
    %v1499 = vstv %s1498
    %v1500 = vmul.f32 %v1490, %v1499
    %v1501 = vmul.f32 %v1491, %v1499
    %v1502 = vadd.f32 %v1476, %v1500
    %v1503 = vadd.f32 %v1477, %v1501
    %s1504 = sld [smem:[#allocation6 + $0x45]]
    %v1505 = vstv %s1504
    %v1506 = vmul.f32 %v1490, %v1505
    %v1507 = vmul.f32 %v1491, %v1505
    %v1508 = vadd.f32 %v1482, %v1506
    %v1509 = vadd.f32 %v1483, %v1507
    %1510 = vrot.lane.b32.xlu0 %v1003, 113
    %v1511 = vpop.permute.xlu0 %1510
    %1512 = vrot.lane.b32.xlu0 %v1004, 113
    %v1513 = vpop.permute.xlu0 %1512
    %v1514 = vsel %vm740, %v1511, %v1513
    %v1515 = vsel %vm740, %v1513, %v1511
    %v1516 = vmul.f32 %v1514, %v729
    %v1517 = vmul.f32 %v1515, %v733
    %s1518 = sld [smem:[#allocation6 + $0x18]]
    %v1519 = vstv %s1518
    %v1520 = vmul.f32 %v1516, %v1519
    %v1521 = vmul.f32 %v1517, %v1519
    %v1522 = vadd.f32 %v1496, %v1520
    %v1523 = vadd.f32 %v1497, %v1521
    %s1524 = sld [smem:[#allocation6 + $0x33]]
    %v1525 = vstv %s1524
    %v1526 = vmul.f32 %v1516, %v1525
    %v1527 = vmul.f32 %v1517, %v1525
    %v1528 = vadd.f32 %v1502, %v1526
    %v1529 = vadd.f32 %v1503, %v1527
    %s1530 = sld [smem:[#allocation6 + $0x4e]]
    %v1531 = vstv %s1530
    %v1532 = vmul.f32 %v1516, %v1531
    %v1533 = vmul.f32 %v1517, %v1531
    %v1534 = vadd.f32 %v1508, %v1532
    %v1535 = vadd.f32 %v1509, %v1533
    %1536 = vrot.lane.b32.xlu0 %v999, 112
    %v1537 = vpop.permute.xlu0 %1536
    %1538 = vrot.lane.b32.xlu0 %v1000, 112
    %v1539 = vpop.permute.xlu0 %1538
    %v1540 = vsel %vm832, %v1537, %v1539
    %v1541 = vsel %vm832, %v1539, %v1537
    %v1542 = vmul.f32 %v1540, %v821
    %v1543 = vmul.f32 %v1541, %v825
    %s1544 = sld [smem:[#allocation6 + $0x7]]
    %v1545 = vstv %s1544
    %v1546 = vmul.f32 %v1542, %v1545
    %v1547 = vmul.f32 %v1543, %v1545
    %v1548 = vadd.f32 %v1522, %v1546
    %v1549 = vadd.f32 %v1523, %v1547
    %s1550 = sld [smem:[#allocation6 + $0x22]]
    %v1551 = vstv %s1550
    %v1552 = vmul.f32 %v1542, %v1551
    %v1553 = vmul.f32 %v1543, %v1551
    %v1554 = vadd.f32 %v1528, %v1552
    %v1555 = vadd.f32 %v1529, %v1553
    %s1556 = sld [smem:[#allocation6 + $0x3d]]
    %v1557 = vstv %s1556
    %v1558 = vmul.f32 %v1542, %v1557
    %v1559 = vmul.f32 %v1543, %v1557
    %v1560 = vadd.f32 %v1534, %v1558
    %v1561 = vadd.f32 %v1535, %v1559
    %1562 = vrot.lane.b32.xlu0 %v1001, 112
    %v1563 = vpop.permute.xlu0 %1562
    %1564 = vrot.lane.b32.xlu0 %v1002, 112
    %v1565 = vpop.permute.xlu0 %1564
    %v1566 = vsel %vm832, %v1563, %v1565
    %v1567 = vsel %vm832, %v1565, %v1563
    %v1568 = vmul.f32 %v1566, %v821
    %v1569 = vmul.f32 %v1567, %v825
    %s1570 = sld [smem:[#allocation6 + $0x10]]
    %v1571 = vstv %s1570
    %v1572 = vmul.f32 %v1568, %v1571
    %v1573 = vmul.f32 %v1569, %v1571
    %v1574 = vadd.f32 %v1548, %v1572
    %v1575 = vadd.f32 %v1549, %v1573
    %s1576 = sld [smem:[#allocation6 + $0x2b]]
    %v1577 = vstv %s1576
    %v1578 = vmul.f32 %v1568, %v1577
    %v1579 = vmul.f32 %v1569, %v1577
    %v1580 = vadd.f32 %v1554, %v1578
    %v1581 = vadd.f32 %v1555, %v1579
    %s1582 = sld [smem:[#allocation6 + $0x46]]
    %v1583 = vstv %s1582
    %v1584 = vmul.f32 %v1568, %v1583
    %v1585 = vmul.f32 %v1569, %v1583
    %v1586 = vadd.f32 %v1560, %v1584
    %v1587 = vadd.f32 %v1561, %v1585
    %1588 = vrot.lane.b32.xlu0 %v1003, 112
    %v1589 = vpop.permute.xlu0 %1588
    %1590 = vrot.lane.b32.xlu0 %v1004, 112
    %v1591 = vpop.permute.xlu0 %1590
    %v1592 = vsel %vm832, %v1589, %v1591
    %v1593 = vsel %vm832, %v1591, %v1589
    %v1594 = vmul.f32 %v1592, %v821
    %v1595 = vmul.f32 %v1593, %v825
    %s1596 = sld [smem:[#allocation6 + $0x19]]
    %v1597 = vstv %s1596
    %v1598 = vmul.f32 %v1594, %v1597
    %v1599 = vmul.f32 %v1595, %v1597
    %v1600 = vadd.f32 %v1574, %v1598
    %v1601 = vadd.f32 %v1575, %v1599
    %s1602 = sld [smem:[#allocation6 + $0x34]]
    %v1603 = vstv %s1602
    %v1604 = vmul.f32 %v1594, %v1603
    %v1605 = vmul.f32 %v1595, %v1603
    %v1606 = vadd.f32 %v1580, %v1604
    %v1607 = vadd.f32 %v1581, %v1605
    %s1608 = sld [smem:[#allocation6 + $0x4f]]
    %v1609 = vstv %s1608
    %v1610 = vmul.f32 %v1594, %v1609
    %v1611 = vmul.f32 %v1595, %v1609
    %v1612 = vadd.f32 %v1586, %v1610
    %v1613 = vadd.f32 %v1587, %v1611
    %1614 = vrot.lane.b32.xlu0 %v999, 111
    %v1615 = vpop.permute.xlu0 %1614
    %1616 = vrot.lane.b32.xlu0 %v1000, 111
    %v1617 = vpop.permute.xlu0 %1616
    %v1618 = vsel %vm924, %v1615, %v1617
    %v1619 = vsel %vm924, %v1617, %v1615
    %v1620 = vmul.f32 %v1618, %v913
    %v1621 = vmul.f32 %v1619, %v917
    %s1622 = sld [smem:[#allocation6 + $0x8]]
    %v1623 = vstv %s1622
    %v1624 = vmul.f32 %v1620, %v1623
    %v1625 = vmul.f32 %v1621, %v1623
    %v1626 = vadd.f32 %v1600, %v1624
    %v1627 = vadd.f32 %v1601, %v1625
    %s1628 = sld [smem:[#allocation6 + $0x23]]
    %v1629 = vstv %s1628
    %v1630 = vmul.f32 %v1620, %v1629
    %v1631 = vmul.f32 %v1621, %v1629
    %v1632 = vadd.f32 %v1606, %v1630
    %v1633 = vadd.f32 %v1607, %v1631
    %s1634 = sld [smem:[#allocation6 + $0x3e]]
    %v1635 = vstv %s1634
    %v1636 = vmul.f32 %v1620, %v1635
    %v1637 = vmul.f32 %v1621, %v1635
    %v1638 = vadd.f32 %v1612, %v1636
    %v1639 = vadd.f32 %v1613, %v1637
    %1640 = vrot.lane.b32.xlu0 %v1001, 111
    %v1641 = vpop.permute.xlu0 %1640
    %1642 = vrot.lane.b32.xlu0 %v1002, 111
    %v1643 = vpop.permute.xlu0 %1642
    %v1644 = vsel %vm924, %v1641, %v1643
    %v1645 = vsel %vm924, %v1643, %v1641
    %v1646 = vmul.f32 %v1644, %v913
    %v1647 = vmul.f32 %v1645, %v917
    %s1648 = sld [smem:[#allocation6 + $0x11]]
    %v1649 = vstv %s1648
    %v1650 = vmul.f32 %v1646, %v1649
    %v1651 = vmul.f32 %v1647, %v1649
    %v1652 = vadd.f32 %v1626, %v1650
    %v1653 = vadd.f32 %v1627, %v1651
    %s1654 = sld [smem:[#allocation6 + $0x2c]]
    %v1655 = vstv %s1654
    %v1656 = vmul.f32 %v1646, %v1655
    %v1657 = vmul.f32 %v1647, %v1655
    %v1658 = vadd.f32 %v1632, %v1656
    %v1659 = vadd.f32 %v1633, %v1657
    %s1660 = sld [smem:[#allocation6 + $0x47]]
    %v1661 = vstv %s1660
    %v1662 = vmul.f32 %v1646, %v1661
    %v1663 = vmul.f32 %v1647, %v1661
    %v1664 = vadd.f32 %v1638, %v1662
    %v1665 = vadd.f32 %v1639, %v1663
    %1666 = vrot.lane.b32.xlu0 %v1003, 111
    %v1667 = vpop.permute.xlu0 %1666
    %1668 = vrot.lane.b32.xlu0 %v1004, 111
    %v1669 = vpop.permute.xlu0 %1668
    %v1670 = vsel %vm924, %v1667, %v1669
    %v1671 = vsel %vm924, %v1669, %v1667
    %v1672 = vmul.f32 %v1670, %v913
    %v1673 = vmul.f32 %v1671, %v917
    %s1674 = sld [smem:[#allocation6 + $0x1a]]
    %v1675 = vstv %s1674
    %v1676 = vmul.f32 %v1672, %v1675
    %v1677 = vmul.f32 %v1673, %v1675
    %v1678 = vadd.f32 %v1652, %v1676
    %v1679 = vadd.f32 %v1653, %v1677
    %s1680 = sld [smem:[#allocation6 + $0x35]]
    %v1681 = vstv %s1680
    %v1682 = vmul.f32 %v1672, %v1681
    %v1683 = vmul.f32 %v1673, %v1681
    %v1684 = vadd.f32 %v1658, %v1682
    %v1685 = vadd.f32 %v1659, %v1683
    %s1686 = sld [smem:[#allocation6 + $0x50]]
    %v1687 = vstv %s1686
    %v1688 = vmul.f32 %v1672, %v1687
    %v1689 = vmul.f32 %v1673, %v1687
    %v1690 = vadd.f32 %v1664, %v1688
    %v1691 = vadd.f32 %v1665, %v1689
    %v1692 = vmax.f32 %v1678, 0.0
    %v1693 = vmax.f32 %v1679, 0.0
    %v1694 = vmax.f32 %v1684, 0.0
    %v1695 = vmax.f32 %v1685, 0.0
    %v1696 = vmax.f32 %v1690, 0.0
    %v1697 = vmax.f32 %v1691, 0.0
    %v1698 = vadd.f32 %v1692, %v104
    %v1699 = vadd.f32 %v1693, %v105
    %v1702 = vcombine.low %v1698, %v1699
    %v1704 = vunpack.c.l.s4 1983009808
    %v1705 = vunpack.c.0.s8 %v1704
    %v1706 = vlaneseq
    %v1707 = vshrl.u32 %v1706, 7
    %v1708 = vsub.s32 %v1705, %v1707
    %v1709 = vrot.slane %v1702, %v1708
    %1711 = vst [vmem:[%s6] sm:$0xf] %v1709
    %v1712 = vadd.f32 %v1694, %v144
    %v1713 = vadd.f32 %v1695, %v145
    %v1716 = vcombine.low %v1712, %v1713
    %v1718 = vunpack.c.l.s4 1983009808
    %v1719 = vunpack.c.0.s8 %v1718
    %v1720 = vlaneseq
    %v1721 = vshrl.u32 %v1720, 7
    %v1722 = vsub.s32 %v1719, %v1721
    %v1723 = vrot.slane %v1716, %v1722
    %s1725 = scalar_lea.vmem %s6, 4
    %1726 = vst [vmem:[%s1725] sm:$0xf] %v1723
    %v1727 = vadd.f32 %v1696, %v181
    %v1728 = vadd.f32 %v1697, %v182
    %v1731 = vcombine.low %v1727, %v1728
    %v1733 = vunpack.c.l.s4 1983009808
    %v1734 = vunpack.c.0.s8 %v1733
    %v1735 = vlaneseq
    %v1736 = vshrl.u32 %v1735, 7
    %v1737 = vsub.s32 %v1734, %v1736
    %v1738 = vrot.slane %v1731, %v1737
    %s1740 = scalar_lea.vmem %s6, 8
    %1741 = vst [vmem:[%s1740] sm:$0xf] %v1738
    // Predicated region
    $region42: #{simple_residual_block.1} parent=1 // pred_check
      _
    $region43: #{simple_residual_block.1} parent=1 // pred_check_branch
      %1743 = sbr.rel (0) target = $region45
    $region44: #{simple_residual_block.1} parent=1 // pred_region
      _
    $region45: #{simple_residual_block.1} parent=1 // pred_fallthru
      _
    // Predicated region
    $region46: #{simple_residual_block.1} parent=1 // pred_check
      _
    $region47: #{simple_residual_block.1} parent=1 // pred_check_branch
      %1745 = sbr.rel (0) target = $region49
    $region48: #{simple_residual_block.1} parent=1 // pred_region
      _
    $region49: #{simple_residual_block.1} parent=1 // pred_fallthru
      _
    %1746 = vsyncpa [#allocation3], 1
    %1747 = vsyncpa [#allocation5], 1
    %1748 = vsyncpa [#allocation8], 1

</llo_original>
